<compile_context>
chip_gen: v5e
topology: v5e:2x2
jax: 0.10.0
libtpu: 0.0.40
codegen_flags: <defaults>
</compile_context>

<pallas_src>
import jax
import jax.numpy as jnp
from jax.experimental import pallas as pl
from jax.experimental.pallas import tpu as pltpu


def _audio_encoder_kernel(x_ref, w1_ref, t1_ref, w2_ref, t2_ref,
                          wp_ref, bp_ref, avg_ref, out_ref):
    """One grid step == Bb batch elements, stacked along rows (R = Bb*T).

    x_ref  : (R, 64)       bf16, channels-last, batches stacked along rows
    w1_ref : (3, 64, 64)   bf16, conv1 weight [tap, Cin, Cout] (BN1 scale folded)
    t1_ref : (1, 64)       f32,  folded conv1-bias + BN1 shift
    w2_ref : (3, 64, 128)  bf16, conv2 weight (BN2 scale folded)
    t2_ref : (1, 128)      f32
    wp_ref : (128, 128)    bf16, linear weight, already [in, out]
    bp_ref : (1, 128)      f32
    avg_ref: (Bb, R)       f32,  masked per-batch mean matrix (selects the L3
                                 valid conv2 rows of each example, weight 1/L3)
    out_ref: (Bb, 128)     f32
    """
    x = x_ref[...]                                   # (R, 64) bf16

    def shift(v, s):
        # rows r -> r+s.  Wrapped / cross-batch rows only ever land on output
        # rows that are invalid conv/pool windows and are masked by avg_ref.
        return jnp.roll(v, -s, axis=0)

    # ---- Conv1d(64->64, k=3): one full-width MXU matmul per tap, shifted add.
    z0 = jnp.dot(x, w1_ref[0], preferred_element_type=jnp.float32)
    z1 = jnp.dot(x, w1_ref[1], preferred_element_type=jnp.float32)
    z2 = jnp.dot(x, w1_ref[2], preferred_element_type=jnp.float32)
    y1 = z0 + shift(z1, 1) + shift(z2, 2)            # (R, 64) f32
    y1 = jnp.maximum(y1 + t1_ref[...], 0.0)          # folded BN1 + ReLU

    # ---- MaxPool1d(2): single pairwise max; pooled index m lives at row 2m.
    p = jnp.maximum(y1, shift(y1, 1)).astype(jnp.bfloat16)   # (R, 64)

    # ---- Conv1d(64->128, k=3) on the stride-2 (uncompacted) pooled rows.
    u0 = jnp.dot(p, w2_ref[0], preferred_element_type=jnp.float32)
    u1 = jnp.dot(p, w2_ref[1], preferred_element_type=jnp.float32)
    u2 = jnp.dot(p, w2_ref[2], preferred_element_type=jnp.float32)
    y2 = u0 + shift(u1, 2) + shift(u2, 4)            # (R, 128) f32
    y2 = jnp.maximum(y2 + t2_ref[...], 0.0)          # folded BN2 + ReLU

    # ---- AdaptiveAvgPool1d(1): masked per-batch mean as one small matmul.
    feat = jnp.dot(avg_ref[...], y2, preferred_element_type=jnp.float32)  # (Bb,128)

    # ---- Linear(128,128) + ReLU   (Dropout(0.2) == identity in eval mode)
    proj = jnp.dot(feat.astype(jnp.bfloat16), wp_ref[...],
                   preferred_element_type=jnp.float32) + bp_ref[...]
    out_ref[...] = jnp.maximum(proj, 0.0).astype(out_ref.dtype)


def _make_avg_matrix(Bb, T):
    """(Bb, Bb*T) f32: row b picks the L3 valid conv2 rows of example b (which
    sit at in-example positions 0,2,...,2*(L3-1)) with weight 1/L3."""
    L3 = (T - 2) // 2 - 2
    r = jnp.arange(Bb * T)[None, :]
    b = jnp.arange(Bb)[:, None]
    pos = r - b * T
    valid = (pos >= 0) & (pos < T) & (pos % 2 == 0) & (pos // 2 < L3)
    return jnp.where(valid, 1.0 / L3, 0.0).astype(jnp.float32)


def audio_encoder_forward(x_nchw, params, *, batch_block=8):
    """x_nchw: (B, 1, 64, T) float32 (PyTorch layout). Returns (B, 128) f32."""
    w1, t1, w2, t2, wp_t, bp = params
    B, one, C, T = x_nchw.shape
    assert one == 1 and C == 64
    assert T >= 8, "need T >= 8 so both valid convs have positive length"
    assert T % 2 == 0, "kernel assumes even T (MaxPool1d(2) pairs stay in-example)"
    # TODO(synk): odd T (PyTorch floors the MaxPool length) is not handled here.

    Bb = min(batch_block, B)
    Bpad = -(-B // Bb) * Bb
    R = Bb * T

    # glue: squeeze(1), channels-last, flatten (batch, time) rows, bf16 for DMA.
    # (The transpose is one extra HBM pass; ideally the producer emits
    #  channels-last directly — noted per review, unavoidable from NCL input.)
    x_blc = jnp.transpose(x_nchw[:, 0, :, :], (0, 2, 1))
    if Bpad != B:
        x_blc = jnp.pad(x_blc, ((0, Bpad - B), (0, 0), (0, 0)))
    x_flat = x_blc.reshape(Bpad * T, 64).astype(jnp.bfloat16)

    avg_mat = _make_avg_matrix(Bb, T)

    out = pl.pallas_call(
        _audio_encoder_kernel,
        out_shape=jax.ShapeDtypeStruct((Bpad, 128), jnp.float32),
        grid_spec=pltpu.PrefetchScalarGridSpec(
            num_scalar_prefetch=0,
            grid=(Bpad // Bb,),
            in_specs=[
                pl.BlockSpec((R, 64), lambda i: (i, 0)),        # x rows
                pl.BlockSpec((3, 64, 64), lambda i: (0, 0, 0)),  # w1 (BN folded)
                pl.BlockSpec((1, 64), lambda i: (0, 0)),         # t1
                pl.BlockSpec((3, 64, 128), lambda i: (0, 0, 0)),  # w2 (BN folded)
                pl.BlockSpec((1, 128), lambda i: (0, 0)),        # t2
                pl.BlockSpec((128, 128), lambda i: (0, 0)),      # wp^T
                pl.BlockSpec((1, 128), lambda i: (0, 0)),        # bp
                pl.BlockSpec((Bb, R), lambda i: (0, 0)),         # avg matrix
            ],
            out_specs=pl.BlockSpec((Bb, 128), lambda i: (i, 0)),
        ),
        compiler_params=pltpu.CompilerParams(
            dimension_semantics=("parallel",)),
    )(x_flat, w1, t1, w2, t2, wp_t, bp, avg_mat)
    return out[:B]


def init_params(key):
    """Deterministic synthetic raw parameters matching the module's shapes."""
    ks = jax.random.split(key, 14)
    p = {}
    p["w1"] = 0.06 * jax.random.normal(ks[0], (3, 64, 64), jnp.float32)   # [tap,Cin,Cout]
    p["b1"] = 0.05 * jax.random.normal(ks[1], (64,), jnp.float32)
    p["g1"] = 1.0 + 0.1 * jax.random.normal(ks[2], (64,), jnp.float32)
    p["be1"] = 0.05 * jax.random.normal(ks[3], (64,), jnp.float32)
    p["m1"] = 0.05 * jax.random.normal(ks[4], (64,), jnp.float32)
    p["v1"] = 1.0 + 0.1 * jnp.abs(jax.random.normal(ks[5], (64,), jnp.float32))
    p["w2"] = 0.06 * jax.random.normal(ks[6], (3, 64, 128), jnp.float32)
    p["b2"] = 0.05 * jax.random.normal(ks[7], (128,), jnp.float32)
    p["g2"] = 1.0 + 0.1 * jax.random.normal(ks[8], (128,), jnp.float32)
    p["be2"] = 0.05 * jax.random.normal(ks[9], (128,), jnp.float32)
    p["m2"] = 0.05 * jax.random.normal(ks[10], (128,), jnp.float32)
    p["v2"] = 1.0 + 0.1 * jnp.abs(jax.random.normal(ks[11], (128,), jnp.float32))
    p["wp"] = 0.08 * jax.random.normal(ks[12], (128, 128), jnp.float32)   # (out, in)
    p["bp"] = 0.05 * jax.random.normal(ks[13], (128,), jnp.float32)
    return p


def prepare_params(raw, eps=1e-5):
    """Fold eval-mode BN scale into the conv weights (shift stays separate),
    transpose the linear weight to [in, out], cast matmul operands to bf16."""
    s1 = raw["g1"] / jnp.sqrt(raw["v1"] + eps)
    t1 = (raw["b1"] - raw["m1"]) * s1 + raw["be1"]
    s2 = raw["g2"] / jnp.sqrt(raw["v2"] + eps)
    t2 = (raw["b2"] - raw["m2"]) * s2 + raw["be2"]
    w1 = (raw["w1"] * s1[None, None, :]).astype(jnp.bfloat16)
    w2 = (raw["w2"] * s2[None, None, :]).astype(jnp.bfloat16)
    wp_t = raw["wp"].T.astype(jnp.bfloat16)
    return (w1, t1.reshape(1, 64).astype(jnp.float32),
            w2, t2.reshape(1, 128).astype(jnp.float32),
            wp_t, raw["bp"].reshape(1, 128).astype(jnp.float32))


def reference_forward(x_nchw, params):
    """Pure-JAX reference using the same folded/bf16 parameters (eval mode)."""
    w1, t1, w2, t2, wp_t, bp = params
    x_blc = jnp.transpose(x_nchw[:, 0, :, :], (0, 2, 1)).astype(jnp.bfloat16)

    def one(xb):
        T = xb.shape[0]
        L1 = T - 2
        y1 = sum(jnp.dot(xb[k:k + L1], w1[k],
                         preferred_element_type=jnp.float32) for k in range(3))
        y1 = jnp.maximum(y1 + t1, 0.0)
        L2 = L1 // 2
        pooled = jnp.maximum(y1[0:2 * L2:2], y1[1:2 * L2:2]).astype(jnp.bfloat16)
        L3 = L2 - 2
        y2 = sum(jnp.dot(pooled[k:k + L3], w2[k],
                         preferred_element_type=jnp.float32) for k in range(3))
        y2 = jnp.maximum(y2 + t2, 0.0)
        feat = jnp.mean(y2, axis=0, keepdims=True).astype(jnp.bfloat16)
        return jnp.maximum(jnp.dot(feat, wp_t,
                                   preferred_element_type=jnp.float32) + bp, 0.0)[0]

    return jax.vmap(one)(x_blc)


if __name__ == "__main__":
    # Module implies input (B, 1, 64, T): squeeze(1) feeds Conv1d(in_channels=64).
    # B=16 with batch_block=8 gives a 2-step "parallel" grid (both v7x cores busy)
    # and M = Bb*T = 128 rows per MXU matmul.
    B, T = 16, 16
    x = jax.random.normal(jax.random.PRNGKey(0), (B, 1, 64, T), jnp.float32)
    params = prepare_params(init_params(jax.random.PRNGKey(42)))

    out = audio_encoder_forward(x, params, batch_block=8)
    out = jax.block_until_ready(out)

    ref = reference_forward(x, params)
    assert out.shape == (B, 128), out.shape
    err = float(jnp.max(jnp.abs(out - ref)))
    assert jnp.allclose(out, ref, rtol=5e-3, atol=5e-3), err
    print("KERNEL_OK")
</pallas_src>

<mosaic_0001>
module attributes {stable_mosaic.version = 11 : i64} {
  func.func @_audio_encoder_kernel(%arg0: i32, %arg1: memref<128x64xbf16, #tpu.memory_space<vmem>>, %arg2: memref<3x64x64xbf16, #tpu.memory_space<vmem>>, %arg3: memref<1x64xf32, #tpu.memory_space<vmem>>, %arg4: memref<3x64x128xbf16, #tpu.memory_space<vmem>>, %arg5: memref<1x128xf32, #tpu.memory_space<vmem>>, %arg6: memref<128x128xbf16, #tpu.memory_space<vmem>>, %arg7: memref<1x128xf32, #tpu.memory_space<vmem>>, %arg8: memref<8x128xf32, #tpu.memory_space<vmem>>, %arg9: memref<8x128xf32, #tpu.memory_space<vmem>>) attributes {dimension_semantics = [#tpu.dimension_semantics<parallel>], iteration_bounds = array<i64: 2>, scalar_prefetch = 0 : i64, scratch_operands = 0 : i64, tpu.core_type = #tpu.core_type<tc>, window_params = [{transform_indices = @transform_0, window_bounds = array<i64: 128, 64>}, {pipeline_mode = #tpu.pipeline_mode<synchronous>, transform_indices = @transform_1, window_bounds = array<i64: 3, 64, 64>}, {pipeline_mode = #tpu.pipeline_mode<synchronous>, transform_indices = @transform_2, window_bounds = array<i64: 1, 64>}, {pipeline_mode = #tpu.pipeline_mode<synchronous>, transform_indices = @transform_3, window_bounds = array<i64: 3, 64, 128>}, {pipeline_mode = #tpu.pipeline_mode<synchronous>, transform_indices = @transform_4, window_bounds = array<i64: 1, 128>}, {pipeline_mode = #tpu.pipeline_mode<synchronous>, transform_indices = @transform_5, window_bounds = array<i64: 128, 128>}, {pipeline_mode = #tpu.pipeline_mode<synchronous>, transform_indices = @transform_6, window_bounds = array<i64: 1, 128>}, {pipeline_mode = #tpu.pipeline_mode<synchronous>, transform_indices = @transform_7, window_bounds = array<i64: 8, 128>}, {transform_indices = @transform_8, window_bounds = array<i64: 8, 128>}]} {
    %c0 = arith.constant 0 : index
    %c0_0 = arith.constant 0 : index
    %0 = vector.load %arg1[%c0, %c0_0] : memref<128x64xbf16, #tpu.memory_space<vmem>>, vector<128x64xbf16>
    %c0_1 = arith.constant 0 : index
    %c0_2 = arith.constant 0 : index
    %c0_3 = arith.constant 0 : index
    %1 = vector.load %arg2[%c0_1, %c0_2, %c0_3] : memref<3x64x64xbf16, #tpu.memory_space<vmem>>, vector<1x64x64xbf16>
    %2 = vector.shape_cast %1 : vector<1x64x64xbf16> to vector<64x64xbf16>
    %cst = arith.constant dense<0.000000e+00> : vector<128x64xf32>
    %3 = tpu.matmul %0, %2, %cst {dimension_numbers = #tpu.dot_dimension_numbers<[1], [0], [0], [1], [0, 0, 1, 1], [], []>} : vector<128x64xbf16>, vector<64x64xbf16>, vector<128x64xf32> -> vector<128x64xf32>
    %c1 = arith.constant 1 : index
    %c0_4 = arith.constant 0 : index
    %c0_5 = arith.constant 0 : index
    %4 = vector.load %arg2[%c1, %c0_4, %c0_5] : memref<3x64x64xbf16, #tpu.memory_space<vmem>>, vector<1x64x64xbf16>
    %5 = vector.shape_cast %4 : vector<1x64x64xbf16> to vector<64x64xbf16>
    %cst_6 = arith.constant dense<0.000000e+00> : vector<128x64xf32>
    %6 = tpu.matmul %0, %5, %cst_6 {dimension_numbers = #tpu.dot_dimension_numbers<[1], [0], [0], [1], [0, 0, 1, 1], [], []>} : vector<128x64xbf16>, vector<64x64xbf16>, vector<128x64xf32> -> vector<128x64xf32>
    %c2 = arith.constant 2 : index
    %c0_7 = arith.constant 0 : index
    %c0_8 = arith.constant 0 : index
    %7 = vector.load %arg2[%c2, %c0_7, %c0_8] : memref<3x64x64xbf16, #tpu.memory_space<vmem>>, vector<1x64x64xbf16>
    %8 = vector.shape_cast %7 : vector<1x64x64xbf16> to vector<64x64xbf16>
    %cst_9 = arith.constant dense<0.000000e+00> : vector<128x64xf32>
    %9 = tpu.matmul %0, %8, %cst_9 {dimension_numbers = #tpu.dot_dimension_numbers<[1], [0], [0], [1], [0, 0, 1, 1], [], []>} : vector<128x64xbf16>, vector<64x64xbf16>, vector<128x64xf32> -> vector<128x64xf32>
    %10 = vector.extract_strided_slice %6 {offsets = [1, 0], sizes = [127, 64], strides = [1, 1]} : vector<128x64xf32> to vector<127x64xf32>
    %11 = vector.extract_strided_slice %6 {offsets = [0, 0], sizes = [1, 64], strides = [1, 1]} : vector<128x64xf32> to vector<1x64xf32>
    %12 = tpu.concatenate %10, %11 in 0 : vector<127x64xf32>, vector<1x64xf32> -> vector<128x64xf32>
    %13 = arith.addf %3, %12 : vector<128x64xf32>
    %14 = vector.extract_strided_slice %9 {offsets = [2, 0], sizes = [126, 64], strides = [1, 1]} : vector<128x64xf32> to vector<126x64xf32>
    %15 = vector.extract_strided_slice %9 {offsets = [0, 0], sizes = [2, 64], strides = [1, 1]} : vector<128x64xf32> to vector<2x64xf32>
    %16 = tpu.concatenate %14, %15 in 0 : vector<126x64xf32>, vector<2x64xf32> -> vector<128x64xf32>
    %17 = arith.addf %13, %16 : vector<128x64xf32>
    %c0_10 = arith.constant 0 : index
    %c0_11 = arith.constant 0 : index
    %18 = vector.load %arg3[%c0_10, %c0_11] : memref<1x64xf32, #tpu.memory_space<vmem>>, vector<1x64xf32>
    %19 = vector.broadcast %18 : vector<1x64xf32> to vector<128x64xf32>
    %20 = arith.addf %17, %19 : vector<128x64xf32>
    %cst_12 = arith.constant 0.000000e+00 : f32
    %21 = vector.broadcast %cst_12 : f32 to vector<128x64xf32>
    %22 = arith.maximumf %20, %21 : vector<128x64xf32>
    %23 = vector.extract_strided_slice %22 {offsets = [1, 0], sizes = [127, 64], strides = [1, 1]} : vector<128x64xf32> to vector<127x64xf32>
    %24 = vector.extract_strided_slice %22 {offsets = [0, 0], sizes = [1, 64], strides = [1, 1]} : vector<128x64xf32> to vector<1x64xf32>
    %25 = tpu.concatenate %23, %24 in 0 : vector<127x64xf32>, vector<1x64xf32> -> vector<128x64xf32>
    %26 = arith.maximumf %22, %25 : vector<128x64xf32>
    %27 = arith.truncf %26 : vector<128x64xf32> to vector<128x64xbf16>
    %c0_13 = arith.constant 0 : index
    %c0_14 = arith.constant 0 : index
    %c0_15 = arith.constant 0 : index
    %28 = vector.load %arg4[%c0_13, %c0_14, %c0_15] : memref<3x64x128xbf16, #tpu.memory_space<vmem>>, vector<1x64x128xbf16>
    %29 = vector.shape_cast %28 : vector<1x64x128xbf16> to vector<64x128xbf16>
    %cst_16 = arith.constant dense<0.000000e+00> : vector<128x128xf32>
    %30 = tpu.matmul %27, %29, %cst_16 {dimension_numbers = #tpu.dot_dimension_numbers<[1], [0], [0], [1], [0, 0, 1, 1], [], []>} : vector<128x64xbf16>, vector<64x128xbf16>, vector<128x128xf32> -> vector<128x128xf32>
    %c1_17 = arith.constant 1 : index
    %c0_18 = arith.constant 0 : index
    %c0_19 = arith.constant 0 : index
    %31 = vector.load %arg4[%c1_17, %c0_18, %c0_19] : memref<3x64x128xbf16, #tpu.memory_space<vmem>>, vector<1x64x128xbf16>
    %32 = vector.shape_cast %31 : vector<1x64x128xbf16> to vector<64x128xbf16>
    %cst_20 = arith.constant dense<0.000000e+00> : vector<128x128xf32>
    %33 = tpu.matmul %27, %32, %cst_20 {dimension_numbers = #tpu.dot_dimension_numbers<[1], [0], [0], [1], [0, 0, 1, 1], [], []>} : vector<128x64xbf16>, vector<64x128xbf16>, vector<128x128xf32> -> vector<128x128xf32>
    %c2_21 = arith.constant 2 : index
    %c0_22 = arith.constant 0 : index
    %c0_23 = arith.constant 0 : index
    %34 = vector.load %arg4[%c2_21, %c0_22, %c0_23] : memref<3x64x128xbf16, #tpu.memory_space<vmem>>, vector<1x64x128xbf16>
    %35 = vector.shape_cast %34 : vector<1x64x128xbf16> to vector<64x128xbf16>
    %cst_24 = arith.constant dense<0.000000e+00> : vector<128x128xf32>
    %36 = tpu.matmul %27, %35, %cst_24 {dimension_numbers = #tpu.dot_dimension_numbers<[1], [0], [0], [1], [0, 0, 1, 1], [], []>} : vector<128x64xbf16>, vector<64x128xbf16>, vector<128x128xf32> -> vector<128x128xf32>
    %37 = vector.extract_strided_slice %33 {offsets = [2, 0], sizes = [126, 128], strides = [1, 1]} : vector<128x128xf32> to vector<126x128xf32>
    %38 = vector.extract_strided_slice %33 {offsets = [0, 0], sizes = [2, 128], strides = [1, 1]} : vector<128x128xf32> to vector<2x128xf32>
    %39 = tpu.concatenate %37, %38 in 0 : vector<126x128xf32>, vector<2x128xf32> -> vector<128x128xf32>
    %40 = arith.addf %30, %39 : vector<128x128xf32>
    %41 = vector.extract_strided_slice %36 {offsets = [4, 0], sizes = [124, 128], strides = [1, 1]} : vector<128x128xf32> to vector<124x128xf32>
    %42 = vector.extract_strided_slice %36 {offsets = [0, 0], sizes = [4, 128], strides = [1, 1]} : vector<128x128xf32> to vector<4x128xf32>
    %43 = tpu.concatenate %41, %42 in 0 : vector<124x128xf32>, vector<4x128xf32> -> vector<128x128xf32>
    %44 = arith.addf %40, %43 : vector<128x128xf32>
    %c0_25 = arith.constant 0 : index
    %c0_26 = arith.constant 0 : index
    %45 = vector.load %arg5[%c0_25, %c0_26] : memref<1x128xf32, #tpu.memory_space<vmem>>, vector<1x128xf32>
    %46 = vector.broadcast %45 : vector<1x128xf32> to vector<128x128xf32>
    %47 = arith.addf %44, %46 : vector<128x128xf32>
    %cst_27 = arith.constant 0.000000e+00 : f32
    %48 = vector.broadcast %cst_27 : f32 to vector<128x128xf32>
    %49 = arith.maximumf %47, %48 : vector<128x128xf32>
    %c0_28 = arith.constant 0 : index
    %c0_29 = arith.constant 0 : index
    %50 = vector.load %arg8[%c0_28, %c0_29] : memref<8x128xf32, #tpu.memory_space<vmem>>, vector<8x128xf32>
    %cst_30 = arith.constant dense<0.000000e+00> : vector<8x128xf32>
    %51 = tpu.matmul %50, %49, %cst_30 {dimension_numbers = #tpu.dot_dimension_numbers<[1], [0], [0], [1], [0, 0, 1, 1], [], []>} : vector<8x128xf32>, vector<128x128xf32>, vector<8x128xf32> -> vector<8x128xf32>
    %52 = arith.truncf %51 : vector<8x128xf32> to vector<8x128xbf16>
    %c0_31 = arith.constant 0 : index
    %c0_32 = arith.constant 0 : index
    %53 = vector.load %arg6[%c0_31, %c0_32] : memref<128x128xbf16, #tpu.memory_space<vmem>>, vector<128x128xbf16>
    %cst_33 = arith.constant dense<0.000000e+00> : vector<8x128xf32>
    %54 = tpu.matmul %52, %53, %cst_33 {dimension_numbers = #tpu.dot_dimension_numbers<[1], [0], [0], [1], [0, 0, 1, 1], [], []>} : vector<8x128xbf16>, vector<128x128xbf16>, vector<8x128xf32> -> vector<8x128xf32>
    %c0_34 = arith.constant 0 : index
    %c0_35 = arith.constant 0 : index
    %55 = vector.load %arg7[%c0_34, %c0_35] : memref<1x128xf32, #tpu.memory_space<vmem>>, vector<1x128xf32>
    %56 = vector.broadcast %55 : vector<1x128xf32> to vector<8x128xf32>
    %57 = arith.addf %54, %56 : vector<8x128xf32>
    %cst_36 = arith.constant 0.000000e+00 : f32
    %58 = vector.broadcast %cst_36 : f32 to vector<8x128xf32>
    %59 = arith.maximumf %57, %58 : vector<8x128xf32>
    %c0_37 = arith.constant 0 : index
    %c0_38 = arith.constant 0 : index
    %60 = vector.load %arg9[%c0_37, %c0_38] : memref<8x128xf32, #tpu.memory_space<vmem>>, vector<8x128xf32>
    tpu.vector_store %arg9[%c0_37, %c0_38], %59 {strides = array<i32>} : memref<8x128xf32, #tpu.memory_space<vmem>>, vector<8x128xf32>,
    return
  }
  func.func @transform_0(%arg0: i32) -> (i32, i32) {
    %c0_i32 = arith.constant 0 : i32
    %c0_i32_0 = arith.constant 0 : i32
    return %arg0, %c0_i32 : i32, i32
  }
  func.func @transform_1(%arg0: i32) -> (i32, i32, i32) {
    %c0_i32 = arith.constant 0 : i32
    %c0_i32_0 = arith.constant 0 : i32
    %c0_i32_1 = arith.constant 0 : i32
    %c0_i32_2 = arith.constant 0 : i32
    return %c0_i32, %c0_i32_0, %c0_i32_1 : i32, i32, i32
  }
  func.func @transform_2(%arg0: i32) -> (i32, i32) {
    %c0_i32 = arith.constant 0 : i32
    %c0_i32_0 = arith.constant 0 : i32
    %c0_i32_1 = arith.constant 0 : i32
    return %c0_i32, %c0_i32_0 : i32, i32
  }
  func.func @transform_3(%arg0: i32) -> (i32, i32, i32) {
    %c0_i32 = arith.constant 0 : i32
    %c0_i32_0 = arith.constant 0 : i32
    %c0_i32_1 = arith.constant 0 : i32
    %c0_i32_2 = arith.constant 0 : i32
    return %c0_i32, %c0_i32_0, %c0_i32_1 : i32, i32, i32
  }
  func.func @transform_4(%arg0: i32) -> (i32, i32) {
    %c0_i32 = arith.constant 0 : i32
    %c0_i32_0 = arith.constant 0 : i32
    %c0_i32_1 = arith.constant 0 : i32
    return %c0_i32, %c0_i32_0 : i32, i32
  }
  func.func @transform_5(%arg0: i32) -> (i32, i32) {
    %c0_i32 = arith.constant 0 : i32
    %c0_i32_0 = arith.constant 0 : i32
    %c0_i32_1 = arith.constant 0 : i32
    return %c0_i32, %c0_i32_0 : i32, i32
  }
  func.func @transform_6(%arg0: i32) -> (i32, i32) {
    %c0_i32 = arith.constant 0 : i32
    %c0_i32_0 = arith.constant 0 : i32
    %c0_i32_1 = arith.constant 0 : i32
    return %c0_i32, %c0_i32_0 : i32, i32
  }
  func.func @transform_7(%arg0: i32) -> (i32, i32) {
    %c0_i32 = arith.constant 0 : i32
    %c0_i32_0 = arith.constant 0 : i32
    %c0_i32_1 = arith.constant 0 : i32
    return %c0_i32, %c0_i32_0 : i32, i32
  }
  func.func @transform_8(%arg0: i32) -> (i32, i32) {
    %c0_i32 = arith.constant 0 : i32
    %c0_i32_0 = arith.constant 0 : i32
    return %arg0, %c0_i32 : i32, i32
  }
}

</mosaic_0001>

<llo_original>
// kernel: tpu_custom_call.1
$region0: #{tpu_custom_call.1}
  #allocation0 [shape = 'u32[]', space=smem, size = 0x4, offset = 0x4, fixed_abs, tag = 'smem constant byte address 0x4 - core index']
  #allocation1 [shape = 'u32[72,128]{1,0:T(1,128)}', space=vmem, size = 0x9000, scoped, tag = 'internal scratch']
  %s0 = inlined_call_operand.vmem [shape: bf16[256,64], index: 0, kind: input, shape index: {}]
  %s1 = inlined_call_operand.vmem [shape: bf16[3,64,64], index: 1, kind: input, shape index: {}]
  %s2 = inlined_call_operand.hbm [shape: f32[1,64], index: 2, kind: input, shape index: {}]
  %s3 = inlined_call_operand.vmem [shape: bf16[3,64,128], index: 3, kind: input, shape index: {}]
  %s4 = inlined_call_operand.vmem [shape: f32[1,128], index: 4, kind: input, shape index: {}]
  %s5 = inlined_call_operand.hbm [shape: bf16[128,128], index: 5, kind: input, shape index: {}]
  %s6 = inlined_call_operand.vmem [shape: f32[1,128], index: 6, kind: input, shape index: {}]
  %s7 = inlined_call_operand.hbm [shape: f32[8,128], index: 7, kind: input, shape index: {}]
  %s8 = inlined_call_operand.hbm [shape: f32[16,128], index: 8, kind: output, shape index: {}]
  %s9 = sld [smem:[#allocation0]]
  $region77: #{tpu_custom_call.1} parent=0
    _
  %s11 = ssub.s32 1, %s9
  %s12 = scalar_select 0, %s11, %s9
  $region1: #{tpu_custom_call.1} parent=0
    #allocation2 [shape = 'u8[512]{0}', space=vmem, size = 0x400, scoped, tag = 'input window, operand 2, single buffered']
    #allocation3 [shape = 's32[2]{0}', space=sflag, size = 0x8, scoped, tag = 'scoped memory for tpu_custom_call.1']
    #allocation4 [shape = 's32[2]{0}', space=sflag, size = 0x8, scoped, tag = 'scoped memory for tpu_custom_call.1']
    #allocation5 [shape = 'u8[32768]{0}', space=vmem, size = 0x8000, scoped, tag = 'input window, operand 5, single buffered']
    #allocation6 [shape = 's32[1]{0}', space=sflag, size = 0x4, scoped, tag = 'scoped memory for tpu_custom_call.1']
    #allocation7 [shape = 'u8[4096]{0}', space=vmem, size = 0x1000, scoped, tag = 'input window, operand 7, single buffered']
    #allocation8 [shape = 'u8[8192]{0}', space=vmem, size = 0x2000, scoped, tag = 'output window, operand 0']
    %13 = vsyncpa [#allocation3], 0
    %14 = vsyncpa [#allocation6], 0
    %15 = vsyncpa [#allocation4], 0
    %s16 = scalar_lea.sflag [#allocation4], 1
    %17 = vsyncpa %s16, 0
    loop: start=0, step=1, limit=4
    $region2: #{tpu_custom_call.1} parent=1 // loop_pre_header
      _
    $region3: #{tpu_custom_call.1} parent=1 // loop_header
      %s19 = sphi 0, %s23
      %p20 = scmp.ge.s32.totalorder %s19, 4
      %s29 = sphi 0, %s31
      %s32 = sphi 0, %s29
      %s33 = sphi 0, %s32
      %s49 = sphi 0, %s33
      %s53 = sphi 0, %s53
      %s55 = sphi 0, %s53
      %s56 = sphi 0, %s55
      %s70 = sphi 0, %s56
      %s74 = sphi 0, %s74
      %s76 = sphi 0, %s74
      %s77 = sphi 0, %s76
      %s91 = sphi 0, %s77
      %s95 = sphi 0, %s95
      %s97 = sphi 0, %s95
      %s98 = sphi 0, %s97
      %s112 = sphi 0, %s98
      %s116 = sphi 0, %s116
      %s118 = sphi 0, %s116
      %s119 = sphi 0, %s118
      %s133 = sphi 0, %s119
      %s137 = sphi 0, %s137
      %s139 = sphi 0, %s137
      %s140 = sphi 0, %s139
      %s154 = sphi 0, %s140
      %s158 = sphi 0, %s158
      %s160 = sphi 0, %s158
      %s161 = sphi 0, %s160
      %s175 = sphi 0, %s161
      %s179 = sphi 0, %s179
      %s181 = sphi 0, %s179
      %s182 = sphi 0, %s181
      %s196 = sphi 0, %s182
      %s202 = sphi 0, %s204
      %s205 = sphi 0, %s202
      %s206 = sphi 0, %s205
      %s222 = sphi 0, %s206
    $region4: #{tpu_custom_call.1} parent=1 // loop_header_branch
      %22 = sbr.rel (%p20) target = $region8
    $region5: #{tpu_custom_call.1} parent=1 // loop_body
      %s24 = ssub.s32 %s19, 1
      %s25 = ssub.s32 %s19, 2
      %s26 = sadd.s32 %s19, 1
      %s27 = ssub.s32 %s19, %s26
      %p28 = scmp.eq.s32.totalorder %s27, 0
      %s30 = sadd.s32 %s29, 1
      %s31 = scalar_select %p28, %s29, %s30
      %p34 = pneg %p28
      %p35 = scmp.eq.s32.totalorder %s19, 1
      %p36 = por %p34, %p35
      %p37 = scmp.ne.s32.totalorder %s29, %s32
      %p38 = scmp.eq.s32.totalorder %s19, 0
      %p39 = por %p37, %p38
      %p40 = scmp.ne.s32.totalorder %s29, %s32
      %p41 = scmp.eq.s32.totalorder %s24, 1
      %p42 = por %p40, %p41
      %p43 = scmp.ne.s32.totalorder %s32, %s33
      %p44 = scmp.eq.s32.totalorder %s24, 0
      %p45 = por %p43, %p44
      %p46 = scmp.ne.s32.totalorder %s32, %s33
      %p47 = scmp.eq.s32.totalorder %s25, 1
      %p48 = por %p46, %p47
      %p50 = scmp.ne.s32.totalorder %s33, %s49
      %p51 = scmp.eq.s32.totalorder %s25, 0
      %p52 = por %p50, %p51
      %s54 = sadd.s32 %s53, 1
      %p57 = scmp.eq.s32.totalorder %s19, 1
      %p58 = scmp.ne.s32.totalorder %s53, %s55
      %p59 = scmp.eq.s32.totalorder %s19, 0
      %p60 = por %p58, %p59
      %p61 = scmp.ne.s32.totalorder %s53, %s55
      %p62 = scmp.eq.s32.totalorder %s24, 1
      %p63 = por %p61, %p62
      %p64 = scmp.ne.s32.totalorder %s55, %s56
      %p65 = scmp.eq.s32.totalorder %s24, 0
      %p66 = por %p64, %p65
      %p67 = scmp.ne.s32.totalorder %s55, %s56
      %p68 = scmp.eq.s32.totalorder %s25, 1
      %p69 = por %p67, %p68
      %p71 = scmp.ne.s32.totalorder %s56, %s70
      %p72 = scmp.eq.s32.totalorder %s25, 0
      %p73 = por %p71, %p72
      %s75 = sadd.s32 %s74, 1
      %p78 = scmp.eq.s32.totalorder %s19, 1
      %p79 = scmp.ne.s32.totalorder %s74, %s76
      %p80 = scmp.eq.s32.totalorder %s19, 0
      %p81 = por %p79, %p80
      %p82 = scmp.ne.s32.totalorder %s74, %s76
      %p83 = scmp.eq.s32.totalorder %s24, 1
      %p84 = por %p82, %p83
      %p85 = scmp.ne.s32.totalorder %s76, %s77
      %p86 = scmp.eq.s32.totalorder %s24, 0
      %p87 = por %p85, %p86
      %p88 = scmp.ne.s32.totalorder %s76, %s77
      %p89 = scmp.eq.s32.totalorder %s25, 1
      %p90 = por %p88, %p89
      %p92 = scmp.ne.s32.totalorder %s77, %s91
      %p93 = scmp.eq.s32.totalorder %s25, 0
      %p94 = por %p92, %p93
      %s96 = sadd.s32 %s95, 1
      %p99 = scmp.eq.s32.totalorder %s19, 1
      %p100 = scmp.ne.s32.totalorder %s95, %s97
      %p101 = scmp.eq.s32.totalorder %s19, 0
      %p102 = por %p100, %p101
      %p103 = scmp.ne.s32.totalorder %s95, %s97
      %p104 = scmp.eq.s32.totalorder %s24, 1
      %p105 = por %p103, %p104
      %p106 = scmp.ne.s32.totalorder %s97, %s98
      %p107 = scmp.eq.s32.totalorder %s24, 0
      %p108 = por %p106, %p107
      %p109 = scmp.ne.s32.totalorder %s97, %s98
      %p110 = scmp.eq.s32.totalorder %s25, 1
      %p111 = por %p109, %p110
      %p113 = scmp.ne.s32.totalorder %s98, %s112
      %p114 = scmp.eq.s32.totalorder %s25, 0
      %p115 = por %p113, %p114
      %s117 = sadd.s32 %s116, 1
      %p120 = scmp.eq.s32.totalorder %s19, 1
      %p121 = scmp.ne.s32.totalorder %s116, %s118
      %p122 = scmp.eq.s32.totalorder %s19, 0
      %p123 = por %p121, %p122
      %p124 = scmp.ne.s32.totalorder %s116, %s118
      %p125 = scmp.eq.s32.totalorder %s24, 1
      %p126 = por %p124, %p125
      %p127 = scmp.ne.s32.totalorder %s118, %s119
      %p128 = scmp.eq.s32.totalorder %s24, 0
      %p129 = por %p127, %p128
      %p130 = scmp.ne.s32.totalorder %s118, %s119
      %p131 = scmp.eq.s32.totalorder %s25, 1
      %p132 = por %p130, %p131
      %p134 = scmp.ne.s32.totalorder %s119, %s133
      %p135 = scmp.eq.s32.totalorder %s25, 0
      %p136 = por %p134, %p135
      %s138 = sadd.s32 %s137, 1
      %p141 = scmp.eq.s32.totalorder %s19, 1
      %p142 = scmp.ne.s32.totalorder %s137, %s139
      %p143 = scmp.eq.s32.totalorder %s19, 0
      %p144 = por %p142, %p143
      %p145 = scmp.ne.s32.totalorder %s137, %s139
      %p146 = scmp.eq.s32.totalorder %s24, 1
      %p147 = por %p145, %p146
      %p148 = scmp.ne.s32.totalorder %s139, %s140
      %p149 = scmp.eq.s32.totalorder %s24, 0
      %p150 = por %p148, %p149
      %p151 = scmp.ne.s32.totalorder %s139, %s140
      %p152 = scmp.eq.s32.totalorder %s25, 1
      %p153 = por %p151, %p152
      %p155 = scmp.ne.s32.totalorder %s140, %s154
      %p156 = scmp.eq.s32.totalorder %s25, 0
      %p157 = por %p155, %p156
      %s159 = sadd.s32 %s158, 1
      %p162 = scmp.eq.s32.totalorder %s19, 1
      %p163 = scmp.ne.s32.totalorder %s158, %s160
      %p164 = scmp.eq.s32.totalorder %s19, 0
      %p165 = por %p163, %p164
      %p166 = scmp.ne.s32.totalorder %s158, %s160
      %p167 = scmp.eq.s32.totalorder %s24, 1
      %p168 = por %p166, %p167
      %p169 = scmp.ne.s32.totalorder %s160, %s161
      %p170 = scmp.eq.s32.totalorder %s24, 0
      %p171 = por %p169, %p170
      %p172 = scmp.ne.s32.totalorder %s160, %s161
      %p173 = scmp.eq.s32.totalorder %s25, 1
      %p174 = por %p172, %p173
      %p176 = scmp.ne.s32.totalorder %s161, %s175
      %p177 = scmp.eq.s32.totalorder %s25, 0
      %p178 = por %p176, %p177
      %s180 = sadd.s32 %s179, 1
      %p183 = scmp.eq.s32.totalorder %s19, 1
      %p184 = scmp.ne.s32.totalorder %s179, %s181
      %p185 = scmp.eq.s32.totalorder %s19, 0
      %p186 = por %p184, %p185
      %p187 = scmp.ne.s32.totalorder %s179, %s181
      %p188 = scmp.eq.s32.totalorder %s24, 1
      %p189 = por %p187, %p188
      %p190 = scmp.ne.s32.totalorder %s181, %s182
      %p191 = scmp.eq.s32.totalorder %s24, 0
      %p192 = por %p190, %p191
      %p193 = scmp.ne.s32.totalorder %s181, %s182
      %p194 = scmp.eq.s32.totalorder %s25, 1
      %p195 = por %p193, %p194
      %p197 = scmp.ne.s32.totalorder %s182, %s196
      %p198 = scmp.eq.s32.totalorder %s25, 0
      %p199 = por %p197, %p198
      %s200 = ssub.s32 %s19, %s26
      %p201 = scmp.eq.s32.totalorder %s200, 0
      %s203 = sadd.s32 %s202, 1
      %s204 = scalar_select %p201, %s202, %s203
      %p207 = pneg %p201
      %p208 = scmp.eq.s32.totalorder %s19, 1
      %p209 = por %p207, %p208
      %p210 = scmp.ne.s32.totalorder %s202, %s205
      %p211 = scmp.eq.s32.totalorder %s19, 0
      %p212 = por %p210, %p211
      %p213 = scmp.ne.s32.totalorder %s202, %s205
      %p214 = scmp.eq.s32.totalorder %s24, 1
      %p215 = por %p213, %p214
      %p216 = scmp.ne.s32.totalorder %s205, %s206
      %p217 = scmp.eq.s32.totalorder %s24, 0
      %p218 = por %p216, %p217
      %p219 = scmp.ne.s32.totalorder %s205, %s206
      %p220 = scmp.eq.s32.totalorder %s25, 1
      %p221 = por %p219, %p220
      %p223 = scmp.ne.s32.totalorder %s206, %s222
      %p224 = scmp.eq.s32.totalorder %s25, 0
      %p225 = por %p223, %p224
      %p226 = scmp.le.s32.totalorder 1, %s19
      %p227 = scmp.lt.s32.totalorder %s19, 3
      %p228 = pnand %p226, %p227
      %p229 = pneg %p228
      // Predicated region
      $region9: #{tpu_custom_call.1} parent=5 // pred_check
        _
      $region10: #{tpu_custom_call.1} parent=5 // pred_check_branch
        %231 = sbr.rel (%p228) target = $region12
      $region11: #{tpu_custom_call.1} parent=5 // pred_region
        %s232 = ssub.s32 %s19, 1
        // Predicated region
        $region13: #{tpu_custom_call.1} parent=11 // pred_check
          %p233 = pneg %p66
        $region14: #{tpu_custom_call.1} parent=11 // pred_check_branch
          %235 = sbr.rel (%p233) target = $region16
        $region15: #{tpu_custom_call.1} parent=11 // pred_region
          _
        $region16: #{tpu_custom_call.1} parent=11 // pred_fallthru
          _
        // Predicated region
        $region17: #{tpu_custom_call.1} parent=11 // pred_check
          %p236 = pneg %p87
        $region18: #{tpu_custom_call.1} parent=11 // pred_check_branch
          %238 = sbr.rel (%p236) target = $region20
        $region19: #{tpu_custom_call.1} parent=11 // pred_region
          %240 = vsyncadd [#allocation3], 0
          %s242 = sshll.u32 %s2, 4
          %s243 = int_to_ptr.hbm [resolvable:$true] %s242
          %s244 = sshll.u32 [#allocation2], 4
          %s245 = int_to_ptr.vmem [resolvable:$true] %s244
          %247 = dma.hbm_to_vmem [thread:$0]  %s243, 16, %s245, [#allocation3]
        $region20: #{tpu_custom_call.1} parent=11 // pred_fallthru
          _
        // Predicated region
        $region21: #{tpu_custom_call.1} parent=11 // pred_check
          %p248 = pneg %p108
        $region22: #{tpu_custom_call.1} parent=11 // pred_check_branch
          %250 = sbr.rel (%p248) target = $region24
        $region23: #{tpu_custom_call.1} parent=11 // pred_region
          _
        $region24: #{tpu_custom_call.1} parent=11 // pred_fallthru
          _
        // Predicated region
        $region25: #{tpu_custom_call.1} parent=11 // pred_check
          %p251 = pneg %p129
        $region26: #{tpu_custom_call.1} parent=11 // pred_check_branch
          %253 = sbr.rel (%p251) target = $region28
        $region27: #{tpu_custom_call.1} parent=11 // pred_region
          _
        $region28: #{tpu_custom_call.1} parent=11 // pred_fallthru
          _
        // Predicated region
        $region29: #{tpu_custom_call.1} parent=11 // pred_check
          %p254 = pneg %p150
        $region30: #{tpu_custom_call.1} parent=11 // pred_check_branch
          %256 = sbr.rel (%p254) target = $region32
        $region31: #{tpu_custom_call.1} parent=11 // pred_region
          %258 = vsyncadd [#allocation6], 0
          %s259 = sshll.u32 %s5, 4
          %s260 = int_to_ptr.hbm [resolvable:$true] %s259
          %s261 = sshll.u32 [#allocation5], 4
          %s262 = int_to_ptr.vmem [resolvable:$true] %s261
          %267 = dma.hbm_to_vmem [thread:$0]  %s260, 1024, %s262, [#allocation6], 64, 64, 4
        $region32: #{tpu_custom_call.1} parent=11 // pred_fallthru
          _
        // Predicated region
        $region33: #{tpu_custom_call.1} parent=11 // pred_check
          %p268 = pneg %p171
        $region34: #{tpu_custom_call.1} parent=11 // pred_check_branch
          %270 = sbr.rel (%p268) target = $region36
        $region35: #{tpu_custom_call.1} parent=11 // pred_region
          _
        $region36: #{tpu_custom_call.1} parent=11 // pred_fallthru
          _
        // Predicated region
        $region37: #{tpu_custom_call.1} parent=11 // pred_check
          %p271 = pneg %p192
        $region38: #{tpu_custom_call.1} parent=11 // pred_check_branch
          %273 = sbr.rel (%p271) target = $region40
        $region39: #{tpu_custom_call.1} parent=11 // pred_region
          %275 = vsyncadd [#allocation6], 0
          %s277 = sshll.u32 %s7, 4
          %s278 = int_to_ptr.hbm [resolvable:$true] %s277
          %s279 = sshll.u32 [#allocation7], 4
          %s280 = int_to_ptr.vmem [resolvable:$true] %s279
          %282 = dma.hbm_to_vmem [thread:$0]  %s278, 128, %s280, [#allocation6]
        $region40: #{tpu_custom_call.1} parent=11 // pred_fallthru
          _
      $region12: #{tpu_custom_call.1} parent=5 // pred_fallthru
        _
      %p283 = scmp.lt.s32.totalorder %s19, 2
      // Predicated region
      $region41: #{tpu_custom_call.1} parent=5 // pred_check
        %p284 = pneg %p283
      $region42: #{tpu_custom_call.1} parent=5 // pred_check_branch
        %286 = sbr.rel (%p284) target = $region44
      $region43: #{tpu_custom_call.1} parent=5 // pred_region
        // Predicated region
        $region45: #{tpu_custom_call.1} parent=43 // pred_check
          %p287 = pneg %p39
        $region46: #{tpu_custom_call.1} parent=43 // pred_check_branch
          %289 = sbr.rel (%p287) target = $region48
        $region47: #{tpu_custom_call.1} parent=43 // pred_region
          %s290 = smul.u32 16, %s19
          %p291 = scmp.lt.s32.totalorder %s290, 31
          %s292 = scalar_select %p291, %s290, 31
          %s293 = smul.addr %s292, 4
          %s294 = scalar_lea.vmem %s0, %s293
          %s295 = smul.u32 16, %s19
        $region48: #{tpu_custom_call.1} parent=43 // pred_fallthru
          _
      $region44: #{tpu_custom_call.1} parent=5 // pred_fallthru
        _
      %p296 = scmp.le.s32.totalorder 1, %s19
      %p297 = scmp.lt.s32.totalorder %s19, 3
      %p298 = pnand %p296, %p297
      %p299 = pneg %p298
      // Predicated region
      $region49: #{tpu_custom_call.1} parent=5 // pred_check
        _
      $region50: #{tpu_custom_call.1} parent=5 // pred_check_branch
        %301 = sbr.rel (%p298) target = $region52
      $region51: #{tpu_custom_call.1} parent=5 // pred_region
        %s302 = ssub.s32 %s19, 1
        // Predicated region
        $region53: #{tpu_custom_call.1} parent=51 // pred_check
          %p303 = pneg %p87
        $region54: #{tpu_custom_call.1} parent=51 // pred_check_branch
          %305 = sbr.rel (%p303) target = $region56
        $region55: #{tpu_custom_call.1} parent=51 // pred_region
          %307 = dma.done [#allocation3], 16
        $region56: #{tpu_custom_call.1} parent=51 // pred_fallthru
          _
        // Predicated region
        $region57: #{tpu_custom_call.1} parent=51 // pred_check
          %p308 = pneg %p150
        $region58: #{tpu_custom_call.1} parent=51 // pred_check_branch
          %310 = sbr.rel (%p308) target = $region60
        $region59: #{tpu_custom_call.1} parent=51 // pred_region
          %312 = dma.done [#allocation6], 1024
        $region60: #{tpu_custom_call.1} parent=51 // pred_fallthru
          _
        // Predicated region
        $region61: #{tpu_custom_call.1} parent=51 // pred_check
          %p313 = pneg %p192
        $region62: #{tpu_custom_call.1} parent=51 // pred_check_branch
          %315 = sbr.rel (%p313) target = $region64
        $region63: #{tpu_custom_call.1} parent=51 // pred_region
          %317 = dma.done [#allocation6], 128
        $region64: #{tpu_custom_call.1} parent=51 // pred_fallthru
          _
        %s318 = smul.u32 16, %s24
        %p319 = scmp.lt.s32.totalorder %s318, 31
        %s320 = scalar_select %p319, %s318, 31
        %s321 = smul.addr %s320, 4
        %s322 = scalar_lea.vmem %s0, %s321
        %p323 = pneg %p45
        %p324 = pneg %p42
        %p325 = pneg %p66
        %p326 = pneg %p63
        %p327 = pneg %p87
        %p328 = pneg %p84
        %p329 = pneg %p108
        %p330 = pneg %p105
        %p331 = pneg %p129
        %p332 = pneg %p126
        %p333 = pneg %p150
        %p334 = pneg %p147
        %p335 = pneg %p171
        %p336 = pneg %p168
        %p337 = pneg %p192
        %p338 = pneg %p189
        %p339 = pneg %p218
        %p340 = pneg %p215
        %s341 = sand.u32 %s205, 1
        %s342 = scalar_lea.sflag [#allocation4], %s341
        %s343 = sand.u32 %s205, 1
        %s344 = smul.addr %s343, 8
        %s345 = scalar_lea.vmem [#allocation8], %s344
        %s346 = smul.u32 16, %s24
        %p347 = scmp.lt.s32.totalorder %s346, 31
        %s348 = scalar_select %p347, %s346, 31
        %s349 = smul.addr %s348, 4
        %s350 = scalar_lea.vmem %s0, %s349
        %s351 = smul.u32 16, %s24
        %v353 = vld [vmem:[%s350] sm:$0xf]
        %v354 = vld [vmem:[%s350 + $0x4] sm:$0xf]
        %v355 = vld [vmem:[%s350 + $0x8] sm:$0xf]
        %v356 = vld [vmem:[%s350 + $0xc] sm:$0xf]
        %v357 = vld [vmem:[%s350 + $0x10] sm:$0xf]
        %v358 = vld [vmem:[%s350 + $0x14] sm:$0xf]
        %v359 = vld [vmem:[%s350 + $0x18] sm:$0xf]
        %v360 = vld [vmem:[%s350 + $0x1c] sm:$0xf]
        %v361 = vld [vmem:[%s350 + $0x20] sm:$0xf]
        %v362 = vld [vmem:[%s350 + $0x24] sm:$0xf]
        %v363 = vld [vmem:[%s350 + $0x28] sm:$0xf]
        %v364 = vld [vmem:[%s350 + $0x2c] sm:$0xf]
        %v365 = vld [vmem:[%s350 + $0x30] sm:$0xf]
        %v366 = vld [vmem:[%s350 + $0x34] sm:$0xf]
        %v367 = vld [vmem:[%s350 + $0x38] sm:$0xf]
        %v368 = vld [vmem:[%s350 + $0x3c] sm:$0xf]
        %v369 = vld [vmem:[%s1] sm:$0xf]
        %v370 = vld [vmem:[%s1 + $0x4] sm:$0xf]
        %v371 = vld [vmem:[%s1 + $0x8] sm:$0xf]
        %v372 = vld [vmem:[%s1 + $0xc] sm:$0xf]
        %v373 = vld [vmem:[%s1 + $0x10] sm:$0xf]
        %v374 = vld [vmem:[%s1 + $0x14] sm:$0xf]
        %v375 = vld [vmem:[%s1 + $0x18] sm:$0xf]
        %v376 = vld [vmem:[%s1 + $0x1c] sm:$0xf]
        %s377 = scalar_lea.vmem %s1, 32
        %v378 = vld [vmem:[%s377] sm:$0xf]
        %v379 = vld [vmem:[%s377 + $0x4] sm:$0xf]
        %v380 = vld [vmem:[%s377 + $0x8] sm:$0xf]
        %v381 = vld [vmem:[%s377 + $0xc] sm:$0xf]
        %v382 = vld [vmem:[%s377 + $0x10] sm:$0xf]
        %v383 = vld [vmem:[%s377 + $0x14] sm:$0xf]
        %v384 = vld [vmem:[%s377 + $0x18] sm:$0xf]
        %v385 = vld [vmem:[%s377 + $0x1c] sm:$0xf]
        %v402 = vunpack.c.l.b16 %v353
        %v403 = vunpack.c.l.b16 %v354
        %v404 = vunpack.c.l.b16 %v355
        %v405 = vunpack.c.l.b16 %v356
        %v406 = vunpack.c.l.b16 %v357
        %v407 = vunpack.c.l.b16 %v358
        %v408 = vunpack.c.l.b16 %v359
        %v409 = vunpack.c.l.b16 %v360
        %v410 = vunpack.c.l.b16 %v361
        %v411 = vunpack.c.l.b16 %v362
        %v412 = vunpack.c.l.b16 %v363
        %v413 = vunpack.c.l.b16 %v364
        %v414 = vunpack.c.l.b16 %v365
        %v415 = vunpack.c.l.b16 %v366
        %v416 = vunpack.c.l.b16 %v367
        %v417 = vunpack.c.l.b16 %v368
        %v418 = vpack.c.b16 %v403, %v402
        %v419 = vpack.c.b16 %v405, %v404
        %v420 = vpack.c.b16 %v407, %v406
        %v421 = vpack.c.b16 %v409, %v408
        %v422 = vpack.c.b16 %v411, %v410
        %v423 = vpack.c.b16 %v413, %v412
        %v424 = vpack.c.b16 %v415, %v414
        %v425 = vpack.c.b16 %v417, %v416
        %v434 = vunpack.c.l.b16 %v378
        %v435 = vunpack.c.l.b16 %v379
        %v436 = vunpack.c.l.b16 %v380
        %v437 = vunpack.c.l.b16 %v381
        %v438 = vunpack.c.l.b16 %v382
        %v439 = vunpack.c.l.b16 %v383
        %v440 = vunpack.c.l.b16 %v384
        %v441 = vunpack.c.l.b16 %v385
        %v442 = vpack.c.b16 %v435, %v434
        %v443 = vpack.c.b16 %v437, %v436
        %v444 = vpack.c.b16 %v439, %v438
        %v445 = vpack.c.b16 %v441, %v440
        %vm450 = vcmask 523264
        %v452 = vsel %vm450, %v418, 0
        %v455 = vsel %vm450, %v419, 0
        %v458 = vsel %vm450, %v420, 0
        %v461 = vsel %vm450, %v421, 0
        %v464 = vsel %vm450, %v422, 0
        %v467 = vsel %vm450, %v423, 0
        %v470 = vsel %vm450, %v424, 0
        %v473 = vsel %vm450, %v425, 0
        %475 = vmatpush.bf16.msra.mxu0 0
        %476 = vmatpush.bf16.msra.mxu0 0
        %477 = vmatpush.bf16.msra.mxu0 0
        %478 = vmatpush.bf16.msra.mxu0 0
        %479 = vmatpush.bf16.msra.mxu0 %v445
        %480 = vmatpush.bf16.msra.mxu0 %v444
        %481 = vmatpush.bf16.msra.mxu0 %v443
        %482 = vmatpush.bf16.msra.mxu0 %v442
        %483 = vmatmul.bf16.gmra.mxu0 %v452
        %v484 = vpop.f32.mrf.mxu0
        %v485 = vadd.f32 0.0, %v484
        %v486 = vpop.f32.mrf.mxu0
        %v487 = vadd.f32 0.0, %v486
        %488 = vmatmul.bf16.gmra.mxu0 %v455
        %v489 = vpop.f32.mrf.mxu0
        %v490 = vadd.f32 0.0, %v489
        %v491 = vpop.f32.mrf.mxu0
        %v492 = vadd.f32 0.0, %v491
        %493 = vmatmul.bf16.gmra.mxu0 %v458
        %v494 = vpop.f32.mrf.mxu0
        %v495 = vadd.f32 0.0, %v494
        %v496 = vpop.f32.mrf.mxu0
        %v497 = vadd.f32 0.0, %v496
        %498 = vmatmul.bf16.gmra.mxu0 %v461
        %v499 = vpop.f32.mrf.mxu0
        %v500 = vadd.f32 0.0, %v499
        %v501 = vpop.f32.mrf.mxu0
        %v502 = vadd.f32 0.0, %v501
        %503 = vmatmul.bf16.gmra.mxu0 %v464
        %v504 = vpop.f32.mrf.mxu0
        %v505 = vadd.f32 0.0, %v504
        %v506 = vpop.f32.mrf.mxu0
        %v507 = vadd.f32 0.0, %v506
        %508 = vmatmul.bf16.gmra.mxu0 %v467
        %v509 = vpop.f32.mrf.mxu0
        %v510 = vadd.f32 0.0, %v509
        %v511 = vpop.f32.mrf.mxu0
        %v512 = vadd.f32 0.0, %v511
        %513 = vmatmul.bf16.gmra.mxu0 %v470
        %v514 = vpop.f32.mrf.mxu0
        %v515 = vadd.f32 0.0, %v514
        %v516 = vpop.f32.mrf.mxu0
        %v517 = vadd.f32 0.0, %v516
        %518 = vmatmul.bf16.gmra.mxu0 %v473
        %v519 = vpop.f32.mrf.mxu0
        %v520 = vadd.f32 0.0, %v519
        %v521 = vpop.f32.mrf.mxu0
        %v522 = vadd.f32 0.0, %v521
        %523 = vdwg.mxu0
        %s524 = scalar_lea.vmem %s1, 64
        %v525 = vld [vmem:[%s524] sm:$0xf]
        %v526 = vld [vmem:[%s524 + $0x4] sm:$0xf]
        %v527 = vld [vmem:[%s524 + $0x8] sm:$0xf]
        %v528 = vld [vmem:[%s524 + $0xc] sm:$0xf]
        %v529 = vld [vmem:[%s524 + $0x10] sm:$0xf]
        %v530 = vld [vmem:[%s524 + $0x14] sm:$0xf]
        %v531 = vld [vmem:[%s524 + $0x18] sm:$0xf]
        %v532 = vld [vmem:[%s524 + $0x1c] sm:$0xf]
        %v541 = vunpack.c.l.b16 %v525
        %v542 = vunpack.c.l.b16 %v526
        %v543 = vunpack.c.l.b16 %v527
        %v544 = vunpack.c.l.b16 %v528
        %v545 = vunpack.c.l.b16 %v529
        %v546 = vunpack.c.l.b16 %v530
        %v547 = vunpack.c.l.b16 %v531
        %v548 = vunpack.c.l.b16 %v532
        %v549 = vpack.c.b16 %v542, %v541
        %v550 = vpack.c.b16 %v544, %v543
        %v551 = vpack.c.b16 %v546, %v545
        %v552 = vpack.c.b16 %v548, %v547
        %557 = vmatpush.bf16.msra.mxu0 0
        %558 = vmatpush.bf16.msra.mxu0 0
        %559 = vmatpush.bf16.msra.mxu0 0
        %560 = vmatpush.bf16.msra.mxu0 0
        %561 = vmatpush.bf16.msra.mxu0 %v552
        %562 = vmatpush.bf16.msra.mxu0 %v551
        %563 = vmatpush.bf16.msra.mxu0 %v550
        %564 = vmatpush.bf16.msra.mxu0 %v549
        %565 = vmatmul.bf16.gmra.mxu0 %v452
        %v566 = vpop.f32.mrf.mxu0
        %v567 = vadd.f32 0.0, %v566
        %v568 = vpop.f32.mrf.mxu0
        %v569 = vadd.f32 0.0, %v568
        %570 = vmatmul.bf16.gmra.mxu0 %v455
        %v571 = vpop.f32.mrf.mxu0
        %v572 = vadd.f32 0.0, %v571
        %v573 = vpop.f32.mrf.mxu0
        %v574 = vadd.f32 0.0, %v573
        %575 = vmatmul.bf16.gmra.mxu0 %v458
        %v576 = vpop.f32.mrf.mxu0
        %v577 = vadd.f32 0.0, %v576
        %v578 = vpop.f32.mrf.mxu0
        %v579 = vadd.f32 0.0, %v578
        %580 = vmatmul.bf16.gmra.mxu0 %v461
        %v581 = vpop.f32.mrf.mxu0
        %v582 = vadd.f32 0.0, %v581
        %v583 = vpop.f32.mrf.mxu0
        %v584 = vadd.f32 0.0, %v583
        %585 = vmatmul.bf16.gmra.mxu0 %v464
        %v586 = vpop.f32.mrf.mxu0
        %v587 = vadd.f32 0.0, %v586
        %v588 = vpop.f32.mrf.mxu0
        %v589 = vadd.f32 0.0, %v588
        %590 = vmatmul.bf16.gmra.mxu0 %v467
        %v591 = vpop.f32.mrf.mxu0
        %v592 = vadd.f32 0.0, %v591
        %v593 = vpop.f32.mrf.mxu0
        %v594 = vadd.f32 0.0, %v593
        %595 = vmatmul.bf16.gmra.mxu0 %v470
        %v596 = vpop.f32.mrf.mxu0
        %v597 = vadd.f32 0.0, %v596
        %v598 = vpop.f32.mrf.mxu0
        %v599 = vadd.f32 0.0, %v598
        %600 = vmatmul.bf16.gmra.mxu0 %v473
        %v601 = vpop.f32.mrf.mxu0
        %v602 = vadd.f32 0.0, %v601
        %v603 = vpop.f32.mrf.mxu0
        %v604 = vadd.f32 0.0, %v603
        %605 = vdwg.mxu0
        %vm622 = vcmask 1046528
        %v623 = vrot.slane %v485, 1
        %v624 = vrot.slane %v487, 1
        %v625 = vsel %vm622, %v623, %v624
        %v626 = vrot.slane %v490, 1
        %v627 = vsel %vm622, %v624, %v626
        %v628 = vrot.slane %v492, 1
        %v629 = vsel %vm622, %v626, %v628
        %v630 = vrot.slane %v495, 1
        %v631 = vsel %vm622, %v628, %v630
        %v632 = vrot.slane %v497, 1
        %v633 = vsel %vm622, %v630, %v632
        %v634 = vrot.slane %v500, 1
        %v635 = vsel %vm622, %v632, %v634
        %v636 = vrot.slane %v502, 1
        %v637 = vsel %vm622, %v634, %v636
        %v638 = vrot.slane %v505, 1
        %v639 = vsel %vm622, %v636, %v638
        %v640 = vrot.slane %v507, 1
        %v641 = vsel %vm622, %v638, %v640
        %v642 = vrot.slane %v510, 1
        %v643 = vsel %vm622, %v640, %v642
        %v644 = vrot.slane %v512, 1
        %v645 = vsel %vm622, %v642, %v644
        %v646 = vrot.slane %v515, 1
        %v647 = vsel %vm622, %v644, %v646
        %v648 = vrot.slane %v517, 1
        %v649 = vsel %vm622, %v646, %v648
        %v650 = vrot.slane %v520, 1
        %v651 = vsel %vm622, %v648, %v650
        %v652 = vrot.slane %v522, 1
        %v653 = vsel %vm622, %v650, %v652
        %v671 = vsel %vm622, %v652, %v623
        %v680 = vunpack.c.l.b16 %v369
        %v681 = vunpack.c.l.b16 %v370
        %v682 = vunpack.c.l.b16 %v371
        %v683 = vunpack.c.l.b16 %v372
        %v684 = vunpack.c.l.b16 %v373
        %v685 = vunpack.c.l.b16 %v374
        %v686 = vunpack.c.l.b16 %v375
        %v687 = vunpack.c.l.b16 %v376
        %v688 = vpack.c.b16 %v681, %v680
        %v689 = vpack.c.b16 %v683, %v682
        %v690 = vpack.c.b16 %v685, %v684
        %v691 = vpack.c.b16 %v687, %v686
        %696 = vmatpush.bf16.msra.mxu0 0
        %697 = vmatpush.bf16.msra.mxu0 0
        %698 = vmatpush.bf16.msra.mxu0 0
        %699 = vmatpush.bf16.msra.mxu0 0
        %700 = vmatpush.bf16.msra.mxu0 %v691
        %701 = vmatpush.bf16.msra.mxu0 %v690
        %702 = vmatpush.bf16.msra.mxu0 %v689
        %703 = vmatpush.bf16.msra.mxu0 %v688
        %704 = vmatmul.bf16.gmra.mxu0 %v452
        %v705 = vpop.f32.mrf.mxu0
        %v706 = vadd.f32 %v625, %v705
        %v707 = vpop.f32.mrf.mxu0
        %v708 = vadd.f32 %v627, %v707
        %709 = vmatmul.bf16.gmra.mxu0 %v455
        %v710 = vpop.f32.mrf.mxu0
        %v711 = vadd.f32 %v629, %v710
        %v712 = vpop.f32.mrf.mxu0
        %v713 = vadd.f32 %v631, %v712
        %714 = vmatmul.bf16.gmra.mxu0 %v458
        %v715 = vpop.f32.mrf.mxu0
        %v716 = vadd.f32 %v633, %v715
        %v717 = vpop.f32.mrf.mxu0
        %v718 = vadd.f32 %v635, %v717
        %719 = vmatmul.bf16.gmra.mxu0 %v461
        %v720 = vpop.f32.mrf.mxu0
        %v721 = vadd.f32 %v637, %v720
        %v722 = vpop.f32.mrf.mxu0
        %v723 = vadd.f32 %v639, %v722
        %724 = vmatmul.bf16.gmra.mxu0 %v464
        %v725 = vpop.f32.mrf.mxu0
        %v726 = vadd.f32 %v641, %v725
        %v727 = vpop.f32.mrf.mxu0
        %v728 = vadd.f32 %v643, %v727
        %729 = vmatmul.bf16.gmra.mxu0 %v467
        %v730 = vpop.f32.mrf.mxu0
        %v731 = vadd.f32 %v645, %v730
        %v732 = vpop.f32.mrf.mxu0
        %v733 = vadd.f32 %v647, %v732
        %734 = vmatmul.bf16.gmra.mxu0 %v470
        %v735 = vpop.f32.mrf.mxu0
        %v736 = vadd.f32 %v649, %v735
        %v737 = vpop.f32.mrf.mxu0
        %v738 = vadd.f32 %v651, %v737
        %739 = vmatmul.bf16.gmra.mxu0 %v473
        %v740 = vpop.f32.mrf.mxu0
        %v741 = vadd.f32 %v653, %v740
        %v742 = vpop.f32.mrf.mxu0
        %v743 = vadd.f32 %v671, %v742
        %744 = vdwg.mxu0
        %vm761 = vcmask 1045504
        %v762 = vrot.slane %v567, 2
        %v763 = vrot.slane %v569, 2
        %v764 = vsel %vm761, %v762, %v763
        %v765 = vrot.slane %v572, 2
        %v766 = vsel %vm761, %v763, %v765
        %v767 = vrot.slane %v574, 2
        %v768 = vsel %vm761, %v765, %v767
        %v769 = vrot.slane %v577, 2
        %v770 = vsel %vm761, %v767, %v769
        %v771 = vrot.slane %v579, 2
        %v772 = vsel %vm761, %v769, %v771
        %v773 = vrot.slane %v582, 2
        %v774 = vsel %vm761, %v771, %v773
        %v775 = vrot.slane %v584, 2
        %v776 = vsel %vm761, %v773, %v775
        %v777 = vrot.slane %v587, 2
        %v778 = vsel %vm761, %v775, %v777
        %v779 = vrot.slane %v589, 2
        %v780 = vsel %vm761, %v777, %v779
        %v781 = vrot.slane %v592, 2
        %v782 = vsel %vm761, %v779, %v781
        %v783 = vrot.slane %v594, 2
        %v784 = vsel %vm761, %v781, %v783
        %v785 = vrot.slane %v597, 2
        %v786 = vsel %vm761, %v783, %v785
        %v787 = vrot.slane %v599, 2
        %v788 = vsel %vm761, %v785, %v787
        %v789 = vrot.slane %v602, 2
        %v790 = vsel %vm761, %v787, %v789
        %v791 = vrot.slane %v604, 2
        %v792 = vsel %vm761, %v789, %v791
        %v810 = vsel %vm761, %v791, %v762
        %v811 = vadd.f32 %v706, %v764
        %v812 = vadd.f32 %v708, %v766
        %v813 = vadd.f32 %v711, %v768
        %v814 = vadd.f32 %v713, %v770
        %v815 = vadd.f32 %v716, %v772
        %v816 = vadd.f32 %v718, %v774
        %v817 = vadd.f32 %v721, %v776
        %v818 = vadd.f32 %v723, %v778
        %v819 = vadd.f32 %v726, %v780
        %v820 = vadd.f32 %v728, %v782
        %v821 = vadd.f32 %v731, %v784
        %v822 = vadd.f32 %v733, %v786
        %v823 = vadd.f32 %v736, %v788
        %v824 = vadd.f32 %v738, %v790
        %v825 = vadd.f32 %v741, %v792
        %v826 = vadd.f32 %v743, %v810
        %v827 = vld [vmem:[#allocation2] sm:$0x1]
        %v829 = vperm.slane %v827, 0
        %v831 = vadd.f32 %v811, %v829
        %v832 = vadd.f32 %v812, %v829
        %v833 = vadd.f32 %v813, %v829
        %v834 = vadd.f32 %v814, %v829
        %v835 = vadd.f32 %v815, %v829
        %v836 = vadd.f32 %v816, %v829
        %v837 = vadd.f32 %v817, %v829
        %v838 = vadd.f32 %v818, %v829
        %v839 = vadd.f32 %v819, %v829
        %v840 = vadd.f32 %v820, %v829
        %v841 = vadd.f32 %v821, %v829
        %v842 = vadd.f32 %v822, %v829
        %v843 = vadd.f32 %v823, %v829
        %v844 = vadd.f32 %v824, %v829
        %v845 = vadd.f32 %v825, %v829
        %v846 = vadd.f32 %v826, %v829
        %v847 = vmax.f32 %v831, 0.0
        %v848 = vmax.f32 %v832, 0.0
        %v849 = vmax.f32 %v833, 0.0
        %v850 = vmax.f32 %v834, 0.0
        %v851 = vmax.f32 %v835, 0.0
        %v852 = vmax.f32 %v836, 0.0
        %v853 = vmax.f32 %v837, 0.0
        %v854 = vmax.f32 %v838, 0.0
        %v855 = vmax.f32 %v839, 0.0
        %v856 = vmax.f32 %v840, 0.0
        %v857 = vmax.f32 %v841, 0.0
        %v858 = vmax.f32 %v842, 0.0
        %v859 = vmax.f32 %v843, 0.0
        %v860 = vmax.f32 %v844, 0.0
        %v861 = vmax.f32 %v845, 0.0
        %v862 = vmax.f32 %v846, 0.0
        %v879 = vrot.slane %v847, 1
        %v880 = vrot.slane %v848, 1
        %v881 = vsel %vm622, %v879, %v880
        %v882 = vrot.slane %v849, 1
        %v883 = vsel %vm622, %v880, %v882
        %v884 = vrot.slane %v850, 1
        %v885 = vsel %vm622, %v882, %v884
        %v886 = vrot.slane %v851, 1
        %v887 = vsel %vm622, %v884, %v886
        %v888 = vrot.slane %v852, 1
        %v889 = vsel %vm622, %v886, %v888
        %v890 = vrot.slane %v853, 1
        %v891 = vsel %vm622, %v888, %v890
        %v892 = vrot.slane %v854, 1
        %v893 = vsel %vm622, %v890, %v892
        %v894 = vrot.slane %v855, 1
        %v895 = vsel %vm622, %v892, %v894
        %v896 = vrot.slane %v856, 1
        %v897 = vsel %vm622, %v894, %v896
        %v898 = vrot.slane %v857, 1
        %v899 = vsel %vm622, %v896, %v898
        %v900 = vrot.slane %v858, 1
        %v901 = vsel %vm622, %v898, %v900
        %v902 = vrot.slane %v859, 1
        %v903 = vsel %vm622, %v900, %v902
        %v904 = vrot.slane %v860, 1
        %v905 = vsel %vm622, %v902, %v904
        %v906 = vrot.slane %v861, 1
        %v907 = vsel %vm622, %v904, %v906
        %v908 = vrot.slane %v862, 1
        %v909 = vsel %vm622, %v906, %v908
        %v927 = vsel %vm622, %v908, %v879
        %v928 = vmax.f32 %v847, %v881
        %v929 = vmax.f32 %v848, %v883
        %v930 = vmax.f32 %v849, %v885
        %v931 = vmax.f32 %v850, %v887
        %v932 = vmax.f32 %v851, %v889
        %v933 = vmax.f32 %v852, %v891
        %v934 = vmax.f32 %v853, %v893
        %v935 = vmax.f32 %v854, %v895
        %v936 = vmax.f32 %v855, %v897
        %v937 = vmax.f32 %v856, %v899
        %v938 = vmax.f32 %v857, %v901
        %v939 = vmax.f32 %v858, %v903
        %v940 = vmax.f32 %v859, %v905
        %v941 = vmax.f32 %v860, %v907
        %v942 = vmax.f32 %v861, %v909
        %v943 = vmax.f32 %v862, %v927
        %v944 = vpack.c.bf16 %v929, %v928
        %v945 = vpack.c.bf16 %v931, %v930
        %v946 = vpack.c.bf16 %v933, %v932
        %v947 = vpack.c.bf16 %v935, %v934
        %v948 = vpack.c.bf16 %v937, %v936
        %v949 = vpack.c.bf16 %v939, %v938
        %v950 = vpack.c.bf16 %v941, %v940
        %v951 = vpack.c.bf16 %v943, %v942
        %v952 = vld [vmem:[%s3] sm:$0xf]
        %v953 = vld [vmem:[%s3 + $0x4] sm:$0xf]
        %v954 = vld [vmem:[%s3 + $0x8] sm:$0xf]
        %v955 = vld [vmem:[%s3 + $0xc] sm:$0xf]
        %v956 = vld [vmem:[%s3 + $0x10] sm:$0xf]
        %v957 = vld [vmem:[%s3 + $0x14] sm:$0xf]
        %v958 = vld [vmem:[%s3 + $0x18] sm:$0xf]
        %v959 = vld [vmem:[%s3 + $0x1c] sm:$0xf]
        %s960 = scalar_lea.vmem %s3, 32
        %v961 = vld [vmem:[%s960] sm:$0xf]
        %v962 = vld [vmem:[%s960 + $0x4] sm:$0xf]
        %v963 = vld [vmem:[%s960 + $0x8] sm:$0xf]
        %v964 = vld [vmem:[%s960 + $0xc] sm:$0xf]
        %v965 = vld [vmem:[%s960 + $0x10] sm:$0xf]
        %v966 = vld [vmem:[%s960 + $0x14] sm:$0xf]
        %v967 = vld [vmem:[%s960 + $0x18] sm:$0xf]
        %v968 = vld [vmem:[%s960 + $0x1c] sm:$0xf]
        %v977 = vunpack.c.l.b16 %v961
        %v978 = vunpack.c.l.b16 %v962
        %v979 = vunpack.c.l.b16 %v963
        %v980 = vunpack.c.l.b16 %v964
        %v981 = vunpack.c.l.b16 %v965
        %v982 = vunpack.c.l.b16 %v966
        %v983 = vunpack.c.l.b16 %v967
        %v984 = vunpack.c.l.b16 %v968
        %v985 = vpack.c.b16 %v978, %v977
        %v986 = vpack.c.b16 %v980, %v979
        %v987 = vpack.c.b16 %v982, %v981
        %v988 = vpack.c.b16 %v984, %v983
        %v994 = vsel %vm450, %v944, 0
        %v997 = vsel %vm450, %v945, 0
        %v1000 = vsel %vm450, %v946, 0
        %v1003 = vsel %vm450, %v947, 0
        %v1006 = vsel %vm450, %v948, 0
        %v1009 = vsel %vm450, %v949, 0
        %v1012 = vsel %vm450, %v950, 0
        %v1015 = vsel %vm450, %v951, 0
        %1017 = vmatpush.bf16.msra.mxu0 0
        %1018 = vmatpush.bf16.msra.mxu0 0
        %1019 = vmatpush.bf16.msra.mxu0 0
        %1020 = vmatpush.bf16.msra.mxu0 0
        %1021 = vmatpush.bf16.msra.mxu0 %v988
        %1022 = vmatpush.bf16.msra.mxu0 %v987
        %1023 = vmatpush.bf16.msra.mxu0 %v986
        %1024 = vmatpush.bf16.msra.mxu0 %v985
        %1025 = vmatmul.bf16.gmra.mxu0 %v994
        %v1026 = vpop.f32.mrf.mxu0
        %v1027 = vadd.f32 0.0, %v1026
        %v1028 = vpop.f32.mrf.mxu0
        %v1029 = vadd.f32 0.0, %v1028
        %1030 = vmatmul.bf16.gmra.mxu0 %v997
        %v1031 = vpop.f32.mrf.mxu0
        %v1032 = vadd.f32 0.0, %v1031
        %v1033 = vpop.f32.mrf.mxu0
        %v1034 = vadd.f32 0.0, %v1033
        %1035 = vmatmul.bf16.gmra.mxu0 %v1000
        %v1036 = vpop.f32.mrf.mxu0
        %v1037 = vadd.f32 0.0, %v1036
        %v1038 = vpop.f32.mrf.mxu0
        %v1039 = vadd.f32 0.0, %v1038
        %1040 = vmatmul.bf16.gmra.mxu0 %v1003
        %v1041 = vpop.f32.mrf.mxu0
        %v1042 = vadd.f32 0.0, %v1041
        %v1043 = vpop.f32.mrf.mxu0
        %v1044 = vadd.f32 0.0, %v1043
        %1045 = vmatmul.bf16.gmra.mxu0 %v1006
        %v1046 = vpop.f32.mrf.mxu0
        %v1047 = vadd.f32 0.0, %v1046
        %v1048 = vpop.f32.mrf.mxu0
        %v1049 = vadd.f32 0.0, %v1048
        %1050 = vmatmul.bf16.gmra.mxu0 %v1009
        %v1051 = vpop.f32.mrf.mxu0
        %v1052 = vadd.f32 0.0, %v1051
        %v1053 = vpop.f32.mrf.mxu0
        %v1054 = vadd.f32 0.0, %v1053
        %1055 = vmatmul.bf16.gmra.mxu0 %v1012
        %v1056 = vpop.f32.mrf.mxu0
        %v1057 = vadd.f32 0.0, %v1056
        %v1058 = vpop.f32.mrf.mxu0
        %v1059 = vadd.f32 0.0, %v1058
        %1060 = vmatmul.bf16.gmra.mxu0 %v1015
        %v1061 = vpop.f32.mrf.mxu0
        %v1062 = vadd.f32 0.0, %v1061
        %v1063 = vpop.f32.mrf.mxu0
        %v1064 = vadd.f32 0.0, %v1063
        %1065 = vdwg.mxu0
        %s1066 = scalar_lea.vmem %s3, 64
        %v1067 = vld [vmem:[%s1066] sm:$0xf]
        %v1068 = vld [vmem:[%s1066 + $0x4] sm:$0xf]
        %v1069 = vld [vmem:[%s1066 + $0x8] sm:$0xf]
        %v1070 = vld [vmem:[%s1066 + $0xc] sm:$0xf]
        %v1071 = vld [vmem:[%s1066 + $0x10] sm:$0xf]
        %v1072 = vld [vmem:[%s1066 + $0x14] sm:$0xf]
        %v1073 = vld [vmem:[%s1066 + $0x18] sm:$0xf]
        %v1074 = vld [vmem:[%s1066 + $0x1c] sm:$0xf]
        %v1083 = vunpack.c.l.b16 %v1067
        %v1084 = vunpack.c.l.b16 %v1068
        %v1085 = vunpack.c.l.b16 %v1069
        %v1086 = vunpack.c.l.b16 %v1070
        %v1087 = vunpack.c.l.b16 %v1071
        %v1088 = vunpack.c.l.b16 %v1072
        %v1089 = vunpack.c.l.b16 %v1073
        %v1090 = vunpack.c.l.b16 %v1074
        %v1091 = vpack.c.b16 %v1084, %v1083
        %v1092 = vpack.c.b16 %v1086, %v1085
        %v1093 = vpack.c.b16 %v1088, %v1087
        %v1094 = vpack.c.b16 %v1090, %v1089
        %1099 = vmatpush.bf16.msra.mxu0 0
        %1100 = vmatpush.bf16.msra.mxu0 0
        %1101 = vmatpush.bf16.msra.mxu0 0
        %1102 = vmatpush.bf16.msra.mxu0 0
        %1103 = vmatpush.bf16.msra.mxu0 %v1094
        %1104 = vmatpush.bf16.msra.mxu0 %v1093
        %1105 = vmatpush.bf16.msra.mxu0 %v1092
        %1106 = vmatpush.bf16.msra.mxu0 %v1091
        %1107 = vmatmul.bf16.gmra.mxu0 %v994
        %v1108 = vpop.f32.mrf.mxu0
        %v1109 = vadd.f32 0.0, %v1108
        %v1110 = vpop.f32.mrf.mxu0
        %v1111 = vadd.f32 0.0, %v1110
        %1112 = vmatmul.bf16.gmra.mxu0 %v997
        %v1113 = vpop.f32.mrf.mxu0
        %v1114 = vadd.f32 0.0, %v1113
        %v1115 = vpop.f32.mrf.mxu0
        %v1116 = vadd.f32 0.0, %v1115
        %1117 = vmatmul.bf16.gmra.mxu0 %v1000
        %v1118 = vpop.f32.mrf.mxu0
        %v1119 = vadd.f32 0.0, %v1118
        %v1120 = vpop.f32.mrf.mxu0
        %v1121 = vadd.f32 0.0, %v1120
        %1122 = vmatmul.bf16.gmra.mxu0 %v1003
        %v1123 = vpop.f32.mrf.mxu0
        %v1124 = vadd.f32 0.0, %v1123
        %v1125 = vpop.f32.mrf.mxu0
        %v1126 = vadd.f32 0.0, %v1125
        %1127 = vmatmul.bf16.gmra.mxu0 %v1006
        %v1128 = vpop.f32.mrf.mxu0
        %v1129 = vadd.f32 0.0, %v1128
        %v1130 = vpop.f32.mrf.mxu0
        %v1131 = vadd.f32 0.0, %v1130
        %1132 = vmatmul.bf16.gmra.mxu0 %v1009
        %v1133 = vpop.f32.mrf.mxu0
        %v1134 = vadd.f32 0.0, %v1133
        %v1135 = vpop.f32.mrf.mxu0
        %v1136 = vadd.f32 0.0, %v1135
        %1137 = vmatmul.bf16.gmra.mxu0 %v1012
        %v1138 = vpop.f32.mrf.mxu0
        %v1139 = vadd.f32 0.0, %v1138
        %v1140 = vpop.f32.mrf.mxu0
        %v1141 = vadd.f32 0.0, %v1140
        %1142 = vmatmul.bf16.gmra.mxu0 %v1015
        %v1143 = vpop.f32.mrf.mxu0
        %v1144 = vadd.f32 0.0, %v1143
        %v1145 = vpop.f32.mrf.mxu0
        %v1146 = vadd.f32 0.0, %v1145
        %1147 = vdwg.mxu0
        %v1164 = vrot.slane %v1027, 2
        %v1165 = vrot.slane %v1029, 2
        %v1166 = vsel %vm761, %v1164, %v1165
        %v1167 = vrot.slane %v1032, 2
        %v1168 = vsel %vm761, %v1165, %v1167
        %v1169 = vrot.slane %v1034, 2
        %v1170 = vsel %vm761, %v1167, %v1169
        %v1171 = vrot.slane %v1037, 2
        %v1172 = vsel %vm761, %v1169, %v1171
        %v1173 = vrot.slane %v1039, 2
        %v1174 = vsel %vm761, %v1171, %v1173
        %v1175 = vrot.slane %v1042, 2
        %v1176 = vsel %vm761, %v1173, %v1175
        %v1177 = vrot.slane %v1044, 2
        %v1178 = vsel %vm761, %v1175, %v1177
        %v1179 = vrot.slane %v1047, 2
        %v1180 = vsel %vm761, %v1177, %v1179
        %v1181 = vrot.slane %v1049, 2
        %v1182 = vsel %vm761, %v1179, %v1181
        %v1183 = vrot.slane %v1052, 2
        %v1184 = vsel %vm761, %v1181, %v1183
        %v1185 = vrot.slane %v1054, 2
        %v1186 = vsel %vm761, %v1183, %v1185
        %v1187 = vrot.slane %v1057, 2
        %v1188 = vsel %vm761, %v1185, %v1187
        %v1189 = vrot.slane %v1059, 2
        %v1190 = vsel %vm761, %v1187, %v1189
        %v1191 = vrot.slane %v1062, 2
        %v1192 = vsel %vm761, %v1189, %v1191
        %v1193 = vrot.slane %v1064, 2
        %v1194 = vsel %vm761, %v1191, %v1193
        %v1212 = vsel %vm761, %v1193, %v1164
        %v1221 = vunpack.c.l.b16 %v952
        %v1222 = vunpack.c.l.b16 %v953
        %v1223 = vunpack.c.l.b16 %v954
        %v1224 = vunpack.c.l.b16 %v955
        %v1225 = vunpack.c.l.b16 %v956
        %v1226 = vunpack.c.l.b16 %v957
        %v1227 = vunpack.c.l.b16 %v958
        %v1228 = vunpack.c.l.b16 %v959
        %v1229 = vpack.c.b16 %v1222, %v1221
        %v1230 = vpack.c.b16 %v1224, %v1223
        %v1231 = vpack.c.b16 %v1226, %v1225
        %v1232 = vpack.c.b16 %v1228, %v1227
        %1237 = vmatpush.bf16.msra.mxu0 0
        %1238 = vmatpush.bf16.msra.mxu0 0
        %1239 = vmatpush.bf16.msra.mxu0 0
        %1240 = vmatpush.bf16.msra.mxu0 0
        %1241 = vmatpush.bf16.msra.mxu0 %v1232
        %1242 = vmatpush.bf16.msra.mxu0 %v1231
        %1243 = vmatpush.bf16.msra.mxu0 %v1230
        %1244 = vmatpush.bf16.msra.mxu0 %v1229
        %1245 = vmatmul.bf16.gmra.mxu0 %v994
        %v1246 = vpop.f32.mrf.mxu0
        %v1247 = vadd.f32 %v1166, %v1246
        %v1248 = vpop.f32.mrf.mxu0
        %v1249 = vadd.f32 %v1168, %v1248
        %1250 = vmatmul.bf16.gmra.mxu0 %v997
        %v1251 = vpop.f32.mrf.mxu0
        %v1252 = vadd.f32 %v1170, %v1251
        %v1253 = vpop.f32.mrf.mxu0
        %v1254 = vadd.f32 %v1172, %v1253
        %1255 = vmatmul.bf16.gmra.mxu0 %v1000
        %v1256 = vpop.f32.mrf.mxu0
        %v1257 = vadd.f32 %v1174, %v1256
        %v1258 = vpop.f32.mrf.mxu0
        %v1259 = vadd.f32 %v1176, %v1258
        %1260 = vmatmul.bf16.gmra.mxu0 %v1003
        %v1261 = vpop.f32.mrf.mxu0
        %v1262 = vadd.f32 %v1178, %v1261
        %v1263 = vpop.f32.mrf.mxu0
        %v1264 = vadd.f32 %v1180, %v1263
        %1265 = vmatmul.bf16.gmra.mxu0 %v1006
        %v1266 = vpop.f32.mrf.mxu0
        %v1267 = vadd.f32 %v1182, %v1266
        %v1268 = vpop.f32.mrf.mxu0
        %v1269 = vadd.f32 %v1184, %v1268
        %1270 = vmatmul.bf16.gmra.mxu0 %v1009
        %v1271 = vpop.f32.mrf.mxu0
        %v1272 = vadd.f32 %v1186, %v1271
        %v1273 = vpop.f32.mrf.mxu0
        %v1274 = vadd.f32 %v1188, %v1273
        %1275 = vmatmul.bf16.gmra.mxu0 %v1012
        %v1276 = vpop.f32.mrf.mxu0
        %v1277 = vadd.f32 %v1190, %v1276
        %v1278 = vpop.f32.mrf.mxu0
        %v1279 = vadd.f32 %v1192, %v1278
        %1280 = vmatmul.bf16.gmra.mxu0 %v1015
        %v1281 = vpop.f32.mrf.mxu0
        %v1282 = vadd.f32 %v1194, %v1281
        %v1283 = vpop.f32.mrf.mxu0
        %v1284 = vadd.f32 %v1212, %v1283
        %1285 = vdwg.mxu0
        %vm1302 = vcmask 1043456
        %v1303 = vrot.slane %v1109, 4
        %v1304 = vrot.slane %v1111, 4
        %v1305 = vsel %vm1302, %v1303, %v1304
        %v1306 = vrot.slane %v1114, 4
        %v1307 = vsel %vm1302, %v1304, %v1306
        %v1308 = vrot.slane %v1116, 4
        %v1309 = vsel %vm1302, %v1306, %v1308
        %v1310 = vrot.slane %v1119, 4
        %v1311 = vsel %vm1302, %v1308, %v1310
        %v1312 = vrot.slane %v1121, 4
        %v1313 = vsel %vm1302, %v1310, %v1312
        %v1314 = vrot.slane %v1124, 4
        %v1315 = vsel %vm1302, %v1312, %v1314
        %v1316 = vrot.slane %v1126, 4
        %v1317 = vsel %vm1302, %v1314, %v1316
        %v1318 = vrot.slane %v1129, 4
        %v1319 = vsel %vm1302, %v1316, %v1318
        %v1320 = vrot.slane %v1131, 4
        %v1321 = vsel %vm1302, %v1318, %v1320
        %v1322 = vrot.slane %v1134, 4
        %v1323 = vsel %vm1302, %v1320, %v1322
        %v1324 = vrot.slane %v1136, 4
        %v1325 = vsel %vm1302, %v1322, %v1324
        %v1326 = vrot.slane %v1139, 4
        %v1327 = vsel %vm1302, %v1324, %v1326
        %v1328 = vrot.slane %v1141, 4
        %v1329 = vsel %vm1302, %v1326, %v1328
        %v1330 = vrot.slane %v1144, 4
        %v1331 = vsel %vm1302, %v1328, %v1330
        %v1332 = vrot.slane %v1146, 4
        %v1333 = vsel %vm1302, %v1330, %v1332
        %v1351 = vsel %vm1302, %v1332, %v1303
        %v1352 = vadd.f32 %v1247, %v1305
        %v1353 = vadd.f32 %v1249, %v1307
        %v1354 = vadd.f32 %v1252, %v1309
        %v1355 = vadd.f32 %v1254, %v1311
        %v1356 = vadd.f32 %v1257, %v1313
        %v1357 = vadd.f32 %v1259, %v1315
        %v1358 = vadd.f32 %v1262, %v1317
        %v1359 = vadd.f32 %v1264, %v1319
        %v1360 = vadd.f32 %v1267, %v1321
        %v1361 = vadd.f32 %v1269, %v1323
        %v1362 = vadd.f32 %v1272, %v1325
        %v1363 = vadd.f32 %v1274, %v1327
        %v1364 = vadd.f32 %v1277, %v1329
        %v1365 = vadd.f32 %v1279, %v1331
        %v1366 = vadd.f32 %v1282, %v1333
        %v1367 = vadd.f32 %v1284, %v1351
        %v1368 = vld [vmem:[%s4] sm:$0x1]
        %v1370 = vperm.slane %v1368, 0
        %v1372 = vadd.f32 %v1352, %v1370
        %v1373 = vadd.f32 %v1353, %v1370
        %v1374 = vadd.f32 %v1354, %v1370
        %v1375 = vadd.f32 %v1355, %v1370
        %v1376 = vadd.f32 %v1356, %v1370
        %v1377 = vadd.f32 %v1357, %v1370
        %v1378 = vadd.f32 %v1358, %v1370
        %v1379 = vadd.f32 %v1359, %v1370
        %v1380 = vadd.f32 %v1360, %v1370
        %v1381 = vadd.f32 %v1361, %v1370
        %v1382 = vadd.f32 %v1362, %v1370
        %v1383 = vadd.f32 %v1363, %v1370
        %v1384 = vadd.f32 %v1364, %v1370
        %v1385 = vadd.f32 %v1365, %v1370
        %v1386 = vadd.f32 %v1366, %v1370
        %v1387 = vadd.f32 %v1367, %v1370
        %v1388 = vmax.f32 %v1372, 0.0
        %v1389 = vmax.f32 %v1373, 0.0
        %v1390 = vmax.f32 %v1374, 0.0
        %v1391 = vmax.f32 %v1375, 0.0
        %v1392 = vmax.f32 %v1376, 0.0
        %v1393 = vmax.f32 %v1377, 0.0
        %v1394 = vmax.f32 %v1378, 0.0
        %v1395 = vmax.f32 %v1379, 0.0
        %v1396 = vmax.f32 %v1380, 0.0
        %v1397 = vmax.f32 %v1381, 0.0
        %v1398 = vmax.f32 %v1382, 0.0
        %v1399 = vmax.f32 %v1383, 0.0
        %v1400 = vmax.f32 %v1384, 0.0
        %v1401 = vmax.f32 %v1385, 0.0
        %v1402 = vmax.f32 %v1386, 0.0
        %v1403 = vmax.f32 %v1387, 0.0
        %v1404 = vld [vmem:[#allocation7] sm:$0xff]
        %1405 = vmatpush.msra.mxu0 %v1403
        %1406 = vmatpush.msra.mxu0 %v1402
        %1407 = vmatpush.msra.mxu0 %v1401
        %1408 = vmatpush.msra.mxu0 %v1400
        %1409 = vmatpush.msra.mxu0 %v1399
        %1410 = vmatpush.msra.mxu0 %v1398
        %1411 = vmatpush.msra.mxu0 %v1397
        %1412 = vmatpush.msra.mxu0 %v1396
        %1413 = vmatpush.msra.mxu0 %v1395
        %1414 = vmatpush.msra.mxu0 %v1394
        %1415 = vmatpush.msra.mxu0 %v1393
        %1416 = vmatpush.msra.mxu0 %v1392
        %1417 = vmatpush.msra.mxu0 %v1391
        %1418 = vmatpush.msra.mxu0 %v1390
        %1419 = vmatpush.msra.mxu0 %v1389
        %1420 = vmatpush.msra.mxu0 %v1388
        %1421 = vmatmul.f32.gmra.mxu0 %v1404
        %v1422 = vpop.f32.mrf.mxu0
        %v1423 = vadd.f32 0.0, %v1422
        %1424 = vdwg.mxu0
        %v1425 = vpack.c.bf16 %v1423, %v1423
        %v1426 = vld [vmem:[#allocation5] sm:$0xf]
        %v1427 = vld [vmem:[#allocation5 + $0x4] sm:$0xf]
        %v1428 = vld [vmem:[#allocation5 + $0x8] sm:$0xf]
        %v1429 = vld [vmem:[#allocation5 + $0xc] sm:$0xf]
        %v1430 = vld [vmem:[#allocation5 + $0x10] sm:$0xf]
        %v1431 = vld [vmem:[#allocation5 + $0x14] sm:$0xf]
        %v1432 = vld [vmem:[#allocation5 + $0x18] sm:$0xf]
        %v1433 = vld [vmem:[#allocation5 + $0x1c] sm:$0xf]
        %v1434 = vld [vmem:[#allocation5 + $0x20] sm:$0xf]
        %v1435 = vld [vmem:[#allocation5 + $0x24] sm:$0xf]
        %v1436 = vld [vmem:[#allocation5 + $0x28] sm:$0xf]
        %v1437 = vld [vmem:[#allocation5 + $0x2c] sm:$0xf]
        %v1438 = vld [vmem:[#allocation5 + $0x30] sm:$0xf]
        %v1439 = vld [vmem:[#allocation5 + $0x34] sm:$0xf]
        %v1440 = vld [vmem:[#allocation5 + $0x38] sm:$0xf]
        %v1441 = vld [vmem:[#allocation5 + $0x3c] sm:$0xf]
        %v1442 = vld [vmem:[%s6] sm:$0x1]
        %v1444 = vperm.slane %v1442, 0
        %v1462 = vunpack.c.l.b16 %v1426
        %v1463 = vunpack.c.l.b16 %v1427
        %v1464 = vunpack.c.l.b16 %v1428
        %v1465 = vunpack.c.l.b16 %v1429
        %v1466 = vunpack.c.l.b16 %v1430
        %v1467 = vunpack.c.l.b16 %v1431
        %v1468 = vunpack.c.l.b16 %v1432
        %v1469 = vunpack.c.l.b16 %v1433
        %v1470 = vunpack.c.l.b16 %v1434
        %v1471 = vunpack.c.l.b16 %v1435
        %v1472 = vunpack.c.l.b16 %v1436
        %v1473 = vunpack.c.l.b16 %v1437
        %v1474 = vunpack.c.l.b16 %v1438
        %v1475 = vunpack.c.l.b16 %v1439
        %v1476 = vunpack.c.l.b16 %v1440
        %v1477 = vunpack.c.l.b16 %v1441
        %v1478 = vpack.c.b16 %v1463, %v1462
        %v1479 = vpack.c.b16 %v1465, %v1464
        %v1480 = vpack.c.b16 %v1467, %v1466
        %v1481 = vpack.c.b16 %v1469, %v1468
        %v1482 = vpack.c.b16 %v1471, %v1470
        %v1483 = vpack.c.b16 %v1473, %v1472
        %v1484 = vpack.c.b16 %v1475, %v1474
        %v1485 = vpack.c.b16 %v1477, %v1476
        %1494 = vmatpush.bf16.msra.mxu0 %v1485
        %1495 = vmatpush.bf16.msra.mxu0 %v1484
        %1496 = vmatpush.bf16.msra.mxu0 %v1483
        %1497 = vmatpush.bf16.msra.mxu0 %v1482
        %1498 = vmatpush.bf16.msra.mxu0 %v1481
        %1499 = vmatpush.bf16.msra.mxu0 %v1480
        %1500 = vmatpush.bf16.msra.mxu0 %v1479
        %1501 = vmatpush.bf16.msra.mxu0 %v1478
        %1502 = vmatmul.bf16.gmra.mxu0 %v1425
        %v1503 = vpop.f32.mrf.mxu0
        %v1504 = vadd.f32 %v1444, %v1503
        %v1505 = vpop.f32.mrf.mxu0
        %1506 = vdwg.mxu0
        %v1507 = vmax.f32 %v1504, 0.0
        %1508 = vst [vmem:[%s345] sm:$0xff] %v1507
        %s1509 = sand.u32 %s205, 1
        %s1510 = scalar_lea.sflag [#allocation4], %s1509
        %s1511 = sand.u32 %s205, 1
        %s1512 = smul.addr %s1511, 8
        %s1513 = scalar_lea.vmem [#allocation8], %s1512
        // Predicated region
        $region65: #{tpu_custom_call.1} parent=51 // pred_check
          %p1514 = pneg %p215
        $region66: #{tpu_custom_call.1} parent=51 // pred_check_branch
          %1516 = sbr.rel (%p1514) target = $region68
        $region67: #{tpu_custom_call.1} parent=51 // pred_region
          %1518 = vsyncadd %s1510, 0
          %s1519 = smul.addr %s24, 8
          %s1520 = scalar_lea.hbm %s8, %s1519
          %s1522 = sshll.u32 %s1513, 4
          %s1523 = int_to_ptr.vmem [resolvable:$true] %s1522
          %s1524 = sshll.u32 %s1520, 4
          %s1525 = int_to_ptr.hbm [resolvable:$true] %s1524
          %1527 = dma.vmem_to_hbm [thread:$0]  %s1523, 128, %s1525, %s1510
        $region68: #{tpu_custom_call.1} parent=51 // pred_fallthru
          _
      $region52: #{tpu_custom_call.1} parent=5 // pred_fallthru
        _
      %p1528 = scmp.le.s32.totalorder 2, %s19
      // Predicated region
      $region69: #{tpu_custom_call.1} parent=5 // pred_check
        %p1529 = pneg %p1528
      $region70: #{tpu_custom_call.1} parent=5 // pred_check_branch
        %1531 = sbr.rel (%p1529) target = $region72
      $region71: #{tpu_custom_call.1} parent=5 // pred_region
        %s1532 = ssub.s32 %s19, 2
        // Predicated region
        $region73: #{tpu_custom_call.1} parent=71 // pred_check
          %p1533 = pneg %p221
        $region74: #{tpu_custom_call.1} parent=71 // pred_check_branch
          %1535 = sbr.rel (%p1533) target = $region76
        $region75: #{tpu_custom_call.1} parent=71 // pred_region
          %s1536 = sand.u32 %s206, 1
          %s1537 = scalar_lea.sflag [#allocation4], %s1536
          %s1538 = sand.u32 %s206, 1
          %s1539 = smul.addr %s1538, 8
          %s1540 = scalar_lea.vmem [#allocation8], %s1539
          %1542 = dma.done %s1537, 128
        $region76: #{tpu_custom_call.1} parent=71 // pred_fallthru
          _
      $region72: #{tpu_custom_call.1} parent=5 // pred_fallthru
        _
    $region6: #{tpu_custom_call.1} parent=1 // loop_footer
      %s23 = sadd.s32 1, %s19
    $region7: #{tpu_custom_call.1} parent=1 // loop_footer_branch
      %18 = sbr.rel target = $region3
    $region8: #{tpu_custom_call.1} parent=1 // loop_exit
      _
    %1543 = vsyncpa [#allocation3], 1
    %s1544 = scalar_lea.sflag [#allocation3], 1
    %1545 = vsyncpa %s1544, 1
    %1546 = vsyncpa [#allocation6], 1
    %1547 = vsyncpa [#allocation4], 1
    %s1548 = scalar_lea.sflag [#allocation4], 1
    %1549 = vsyncpa %s1548, 1

</llo_original>
